<compile_context>
chip_gen: v5e
topology: v5e:2x2
jax: 0.10.0
libtpu: 0.0.40
codegen_flags: <defaults>
</compile_context>

<pallas_src>
import functools

import jax
import jax.numpy as jnp
from jax.experimental import pallas as pl
from jax.experimental.pallas import tpu as pltpu
import numpy as np


# ----------------------------- Pallas kernel --------------------------------

def tgcn_graph_conv_kernel(inp_ref, hid_ref, lap_ref, maskb_ref,
                           w_in_ref, w_hid_ref, attn_blk_ref, b_lap_ref,
                           out_ref, scr_ref, *, num_heads: int, head_dim: int,
                           num_nodes: int, lap_dim: int):
    """One grid step == b_block batch elements (rows pre-flattened to 2D).

    inp_ref     : (b_block*N, Din)    bf16   raw inputs (batch rows stacked)
    hid_ref     : (b_block*N, Dg)     bf16   hidden state
    lap_ref     : (N, N)              bf16   normalized laplacian (self loops)
    maskb_ref   : (N, N)              bf16   additive mask bias (0 or -1e9)
    w_in_ref    : (Din, HD+O)         bf16   fused [W_gat | W_lap] input rows
    w_hid_ref   : (Dg,  HD+O)         bf16   fused [W_gat | W_lap] hidden rows
    attn_blk_ref: (HD, 2H)            bf16   block attention matrix (src|dst)
    b_lap_ref   : (1, O)              f32    laplacian-branch bias
    out_ref     : (b_block*N, HD+O)   f32    concat-fusion output
    scr_ref     : (N, HD+O)           f32    VMEM assembly slab
    """
    f32 = jnp.float32
    bf16 = jnp.bfloat16
    H, d, N, O = num_heads, head_dim, num_nodes, lap_dim
    HD = H * d
    b_block = inp_ref.shape[0] // N

    lap = lap_ref[...]                              # (N, N)  bf16
    maskb = maskb_ref[...].astype(f32)[None, :, :]  # (1, N, N) f32 additive
    b_lap = b_lap_ref[...]                          # (1, O)  f32

    # ---- fused projection for BOTH branches over all b_block*N rows ----
    # X @ [W_gat | W_lap] == inputs @ W[:Din] + hidden @ W[Din:]  (no concat)
    proj = (jnp.dot(inp_ref[...], w_in_ref[...], preferred_element_type=f32)
            + jnp.dot(hid_ref[...], w_hid_ref[...], preferred_element_type=f32))
    proj_bf = proj.astype(bf16)                     # (b_block*N, HD+O)
    h_bf = proj_bf[:, :HD]                          # GAT features
    z_bf = proj_bf[:, HD:]                          # laplacian-branch X@W

    # All heads' src/dst attention scores in ONE matmul:
    # cols [0,H) = a_src · h_head,  cols [H,2H) = a_dst · h_head.
    s_all = jnp.dot(h_bf, attn_blk_ref[...], preferred_element_type=f32)

    for b in range(b_block):
        r0, r1 = b * N, (b + 1) * N

        # Head-stacked scores: e3[h, i, j] = s_src[i, h] + s_dst[j, h].
        s_src_t = s_all[r0:r1, :H].T                # (H, N)  (one transpose)
        s_dst_t = s_all[r0:r1, H:].T                # (H, N)  (one transpose)
        e3 = s_src_t[:, :, None] + s_dst_t[:, None, :]      # (H, N, N)
        e3 = jnp.maximum(e3, 0.2 * e3)                      # LeakyReLU(0.2)
        e3 = e3 + maskb                                     # additive -1e9 mask
        e3 = e3 - jnp.max(e3, axis=-1, keepdims=True)
        p3 = jnp.exp(e3)
        inv = pl.reciprocal(jnp.sum(p3, axis=-1, keepdims=True), approx=True)
        p3 = (p3 * inv).astype(bf16)                        # (H, N, N) bf16
        # TODO(synk): attention dropout (p=0.6) skipped -> eval-mode forward.
        # TODO(synk): for production node counts, tile the key/column dim
        # flash-style (and raise vmem_limit_bytes) so the resident (N,N)
        # laplacian/mask/score blocks fit v7x's 64 MiB VMEM.

        # Per-head aggregation into the f32 VMEM slab (8 tiny MXU matmuls).
        hb = h_bf[r0:r1]                                    # (N, HD) bf16
        for h in range(H):
            scr_ref[:, h * d:(h + 1) * d] = jnp.dot(
                p3[h], hb[:, h * d:(h + 1) * d], preferred_element_type=f32)

        # Laplacian branch: (L @ X) @ W + b == L @ (X @ W) + b.
        scr_ref[:, HD:] = (jnp.dot(lap, z_bf[r0:r1],
                                   preferred_element_type=f32) + b_lap)

        # ONE lane-dense store of the full (N, HD+O) slab per batch element.
        # TODO(synk): emit bf16 output here if the consuming GRU gates allow it.
        out_ref[r0:r1, :] = scr_ref[...]


# ------------------------------ wrapper --------------------------------------

def tgcn_graph_convolution(inputs, hidden_state, adj_mask, laplacian,
                           w_gat, attn, w_lap, b_lap, *, num_heads,
                           b_block=None):
    """inputs: (B, N, input_dim), hidden_state: (B, N, num_gru_units)."""
    B, N, Din = inputs.shape
    Dg = hidden_state.shape[-1]
    HD = w_gat.shape[1]              # num_heads * head_dim
    d = HD // num_heads
    O = w_lap.shape[1]
    out_dim = HD + O                 # fusion='concat'
    bf16 = jnp.bfloat16

    # Fold batch into each grid step, but keep >= 2 grid steps so both
    # TensorCores on v7x get work (v5e/v6e have one TC; 2 steps costs little).
    if b_block is None:
        target_steps = 2 if B >= 2 else 1
        b_block = next(bb for bb in range(max(1, B // target_steps), 0, -1)
                       if B % bb == 0)
    assert B % b_block == 0
    n_steps = B // b_block

    # Fused projection weights [W_gat | W_lap], then split input/hidden rows
    # (X @ W == inputs @ W[:Din] + hidden @ W[Din:] -> no data concat needed).
    w_full = jnp.concatenate([w_gat, w_lap], axis=1)        # (Din+Dg, HD+O)
    w_in_full, w_hid_full = w_full[:Din], w_full[Din:]

    # Block attention matrix: column h holds a_src in head-h's rows, column H+h
    # holds a_dst -> one matmul yields every head's src/dst scores.
    eye_h = jnp.eye(num_heads, dtype=jnp.float32)
    attn_blk = jnp.concatenate(
        [jnp.kron(eye_h, attn[:d]), jnp.kron(eye_h, attn[d:])], axis=1)  # (HD, 2H)

    # Additive mask bias, computed once, shipped as bf16 (exp(-1e9) is still 0).
    mask_bias = jnp.where(adj_mask == 0, jnp.float32(-1e9),
                          jnp.float32(0.0)).astype(bf16)

    b_lap2 = b_lap.reshape(1, O).astype(jnp.float32)

    # Pre-flatten batch into rows (contiguous reshape, free at the XLA level)
    # so the kernel sees clean 2D operands and writes a lane-dense output slab.
    inputs2 = inputs.reshape(B * N, Din).astype(bf16)
    hidden2 = hidden_state.reshape(B * N, Dg).astype(bf16)

    kernel = functools.partial(tgcn_graph_conv_kernel,
                               num_heads=num_heads, head_dim=d,
                               num_nodes=N, lap_dim=O)

    out2 = pl.pallas_call(
        kernel,
        out_shape=jax.ShapeDtypeStruct((B * N, out_dim), jnp.float32),
        grid_spec=pltpu.PrefetchScalarGridSpec(
            num_scalar_prefetch=0,
            grid=(n_steps,),
            in_specs=[
                pl.BlockSpec((b_block * N, Din), lambda g: (g, 0)),      # inputs
                pl.BlockSpec((b_block * N, Dg), lambda g: (g, 0)),       # hidden
                pl.BlockSpec((N, N), lambda g: (0, 0)),                  # laplacian
                pl.BlockSpec((N, N), lambda g: (0, 0)),                  # mask bias
                pl.BlockSpec((Din, HD + O), lambda g: (0, 0)),           # W[:Din]
                pl.BlockSpec((Dg, HD + O), lambda g: (0, 0)),            # W[Din:]
                pl.BlockSpec((HD, 2 * num_heads), lambda g: (0, 0)),     # attn block
                pl.BlockSpec((1, O), lambda g: (0, 0)),                  # bias
            ],
            out_specs=pl.BlockSpec((b_block * N, out_dim), lambda g: (g, 0)),
            scratch_shapes=[pltpu.VMEM((N, out_dim), jnp.float32)],
        ),
        compiler_params=pltpu.CompilerParams(
            dimension_semantics=("parallel",)),
    )(inputs2, hidden2, laplacian.astype(bf16), mask_bias,
      w_in_full.astype(bf16), w_hid_full.astype(bf16), attn_blk.astype(bf16),
      b_lap2)

    return out2.reshape(B, N, out_dim)


# ------------------------- setup / reference ---------------------------------

def calculate_laplacian_with_self_loop(adj):
    a = adj + jnp.eye(adj.shape[0], dtype=adj.dtype)
    row_sum = a.sum(axis=1)
    d_inv_sqrt = jnp.power(row_sum, -0.5)
    d_inv_sqrt = jnp.where(jnp.isinf(d_inv_sqrt), 0.0, d_inv_sqrt)
    d_mat = jnp.diag(d_inv_sqrt)
    return (a @ d_mat).T @ d_mat


def xavier_uniform(key, shape):
    fan_in, fan_out = shape[0], shape[1]
    bound = float(np.sqrt(6.0 / (fan_in + fan_out)))
    return jax.random.uniform(key, shape, jnp.float32, -bound, bound)


def reference_forward(inputs, hidden_state, adj_mask, laplacian,
                      w_gat, attn, w_lap, b_lap, *, num_heads):
    """Pure-JAX reference mirroring the PyTorch forward in eval mode.

    Matmul operands are cast to bf16 (with f32 accumulation) to mirror the
    kernel's MXU precision; the per-head score decomposition
    (pair @ attn == h_i·a_src + h_j·a_dst) is mathematically identical to the
    module's materialized (N, N, 2d) pair tensor.
    """
    bf16, f32 = jnp.bfloat16, jnp.float32
    x = jnp.concatenate([inputs, hidden_state], axis=-1)
    d = attn.shape[0] // 2
    x_bf = x.astype(bf16)
    h_trans = jnp.einsum("bnf,fk->bnk", x_bf, w_gat.astype(bf16),
                         preferred_element_type=f32)
    h_bf = h_trans.astype(bf16)
    a_src = attn[:d, 0].astype(bf16)
    a_dst = attn[d:, 0].astype(bf16)
    outs = []
    for h in range(num_heads):
        hh = h_bf[..., h * d:(h + 1) * d]                      # (B, N, d)
        s_i = jnp.einsum("bnd,d->bn", hh, a_src, preferred_element_type=f32)
        s_j = jnp.einsum("bnd,d->bn", hh, a_dst, preferred_element_type=f32)
        e = s_i[:, :, None] + s_j[:, None, :]
        e = jnp.where(e > 0, e, 0.2 * e)
        e = jnp.where(adj_mask[None] == 0, -1e9, e)
        p = jax.nn.softmax(e, axis=-1)
        outs.append(jnp.einsum("bij,bjd->bid", p.astype(bf16), hh,
                               preferred_element_type=f32))
    gat_out = jnp.concatenate(outs, axis=-1)
    z = jnp.einsum("bnf,fo->bno", x_bf, w_lap.astype(bf16),
                   preferred_element_type=f32)
    lap_out = jnp.einsum("ij,bjo->bio", laplacian.astype(bf16),
                         z.astype(bf16), preferred_element_type=f32) + b_lap
    return jnp.concatenate([gat_out, lap_out], axis=-1)


if __name__ == "__main__":
    # Small, module-consistent shapes (batch=4 so the batch-folded grid still
    # has 2 steps: b_block=2, grid=(2,)).
    batch = 4
    num_nodes = 16
    input_dim = 4
    num_gru_units = 32
    output_dim = 32
    num_heads = 8
    head_dim = output_dim // num_heads
    feat = input_dim + num_gru_units

    key = jax.random.PRNGKey(0)
    k_adj, k_in, k_hid, k_w, k_a, k_wl, k_bl = jax.random.split(key, 7)

    # Deterministic symmetric 0/1 adjacency with self loops.
    a_rand = jax.random.uniform(k_adj, (num_nodes, num_nodes))
    adj = (a_rand + a_rand.T > 1.0).astype(jnp.float32)
    adj = jnp.maximum(adj, jnp.eye(num_nodes, dtype=jnp.float32))

    laplacian = calculate_laplacian_with_self_loop(adj)

    inputs = jax.random.normal(k_in, (batch, num_nodes, input_dim), jnp.float32)
    hidden = jax.random.normal(k_hid, (batch, num_nodes, num_gru_units), jnp.float32)

    # Parameters (shapes matching the module's __init__).
    w_gat = xavier_uniform(k_w, (feat, head_dim * num_heads))
    attn = xavier_uniform(k_a, (2 * head_dim, 1))
    w_lap = jax.random.normal(k_wl, (feat, output_dim), jnp.float32)
    b_lap = jax.random.normal(k_bl, (output_dim,), jnp.float32)

    out = tgcn_graph_convolution(inputs, hidden, adj, laplacian,
                                 w_gat, attn, w_lap, b_lap,
                                 num_heads=num_heads)
    out = jax.block_until_ready(out)

    ref = reference_forward(inputs, hidden, adj, laplacian,
                            w_gat, attn, w_lap, b_lap, num_heads=num_heads)
    np.testing.assert_allclose(np.asarray(out), np.asarray(ref),
                               rtol=1e-2, atol=1e-2)
    assert out.shape == (batch, num_nodes, 2 * output_dim)
    print("KERNEL_OK")
</pallas_src>

<mosaic_0001>
module attributes {stable_mosaic.version = 11 : i64} {
  func.func @tgcn_graph_conv_kernel(%arg0: i32, %arg1: memref<32x4xbf16, #tpu.memory_space<vmem>>, %arg2: memref<32x32xbf16, #tpu.memory_space<vmem>>, %arg3: memref<16x16xbf16, #tpu.memory_space<vmem>>, %arg4: memref<16x16xbf16, #tpu.memory_space<vmem>>, %arg5: memref<4x64xbf16, #tpu.memory_space<vmem>>, %arg6: memref<32x64xbf16, #tpu.memory_space<vmem>>, %arg7: memref<32x16xbf16, #tpu.memory_space<vmem>>, %arg8: memref<1x32xf32, #tpu.memory_space<vmem>>, %arg9: memref<32x64xf32, #tpu.memory_space<vmem>>, %arg10: memref<16x64xf32, #tpu.memory_space<vmem>>) attributes {dimension_semantics = [#tpu.dimension_semantics<parallel>], iteration_bounds = array<i64: 2>, scalar_prefetch = 0 : i64, scratch_operands = 1 : i64, tpu.core_type = #tpu.core_type<tc>, window_params = [{transform_indices = @transform_0, window_bounds = array<i64: 32, 4>}, {transform_indices = @transform_1, window_bounds = array<i64: 32, 32>}, {pipeline_mode = #tpu.pipeline_mode<synchronous>, transform_indices = @transform_2, window_bounds = array<i64: 16, 16>}, {pipeline_mode = #tpu.pipeline_mode<synchronous>, transform_indices = @transform_3, window_bounds = array<i64: 16, 16>}, {pipeline_mode = #tpu.pipeline_mode<synchronous>, transform_indices = @transform_4, window_bounds = array<i64: 4, 64>}, {pipeline_mode = #tpu.pipeline_mode<synchronous>, transform_indices = @transform_5, window_bounds = array<i64: 32, 64>}, {pipeline_mode = #tpu.pipeline_mode<synchronous>, transform_indices = @transform_6, window_bounds = array<i64: 32, 16>}, {pipeline_mode = #tpu.pipeline_mode<synchronous>, transform_indices = @transform_7, window_bounds = array<i64: 1, 32>}, {transform_indices = @transform_8, window_bounds = array<i64: 32, 64>}]} {
    %c0 = arith.constant 0 : index
    %c0_0 = arith.constant 0 : index
    %0 = vector.load %arg3[%c0, %c0_0] : memref<16x16xbf16, #tpu.memory_space<vmem>>, vector<16x16xbf16>
    %c0_1 = arith.constant 0 : index
    %c0_2 = arith.constant 0 : index
    %1 = vector.load %arg4[%c0_1, %c0_2] : memref<16x16xbf16, #tpu.memory_space<vmem>>, vector<16x16xbf16>
    %2 = arith.extf %1 : vector<16x16xbf16> to vector<16x16xf32>
    %3 = vector.shape_cast %2 : vector<16x16xf32> to vector<1x16x16xf32>
    %c0_3 = arith.constant 0 : index
    %c0_4 = arith.constant 0 : index
    %4 = vector.load %arg8[%c0_3, %c0_4] : memref<1x32xf32, #tpu.memory_space<vmem>>, vector<1x32xf32>
    %c0_5 = arith.constant 0 : index
    %c0_6 = arith.constant 0 : index
    %5 = vector.load %arg1[%c0_5, %c0_6] : memref<32x4xbf16, #tpu.memory_space<vmem>>, vector<32x4xbf16>
    %c0_7 = arith.constant 0 : index
    %c0_8 = arith.constant 0 : index
    %6 = vector.load %arg5[%c0_7, %c0_8] : memref<4x64xbf16, #tpu.memory_space<vmem>>, vector<4x64xbf16>
    %cst = arith.constant dense<0.000000e+00> : vector<32x64xf32>
    %7 = tpu.matmul %5, %6, %cst {dimension_numbers = #tpu.dot_dimension_numbers<[1], [0], [0], [1], [0, 0, 1, 1], [], []>} : vector<32x4xbf16>, vector<4x64xbf16>, vector<32x64xf32> -> vector<32x64xf32>
    %c0_9 = arith.constant 0 : index
    %c0_10 = arith.constant 0 : index
    %8 = vector.load %arg2[%c0_9, %c0_10] : memref<32x32xbf16, #tpu.memory_space<vmem>>, vector<32x32xbf16>
    %c0_11 = arith.constant 0 : index
    %c0_12 = arith.constant 0 : index
    %9 = vector.load %arg6[%c0_11, %c0_12] : memref<32x64xbf16, #tpu.memory_space<vmem>>, vector<32x64xbf16>
    %cst_13 = arith.constant dense<0.000000e+00> : vector<32x64xf32>
    %10 = tpu.matmul %8, %9, %cst_13 {dimension_numbers = #tpu.dot_dimension_numbers<[1], [0], [0], [1], [0, 0, 1, 1], [], []>} : vector<32x32xbf16>, vector<32x64xbf16>, vector<32x64xf32> -> vector<32x64xf32>
    %11 = arith.addf %7, %10 : vector<32x64xf32>
    %12 = arith.truncf %11 : vector<32x64xf32> to vector<32x64xbf16>
    %13 = vector.extract_strided_slice %12 {offsets = [0, 0], sizes = [32, 32], strides = [1, 1]} : vector<32x64xbf16> to vector<32x32xbf16>
    %14 = vector.extract_strided_slice %12 {offsets = [0, 32], sizes = [32, 32], strides = [1, 1]} : vector<32x64xbf16> to vector<32x32xbf16>
    %c0_14 = arith.constant 0 : index
    %c0_15 = arith.constant 0 : index
    %15 = vector.load %arg7[%c0_14, %c0_15] : memref<32x16xbf16, #tpu.memory_space<vmem>>, vector<32x16xbf16>
    %cst_16 = arith.constant dense<0.000000e+00> : vector<32x16xf32>
    %16 = tpu.matmul %13, %15, %cst_16 {dimension_numbers = #tpu.dot_dimension_numbers<[1], [0], [0], [1], [0, 0, 1, 1], [], []>} : vector<32x32xbf16>, vector<32x16xbf16>, vector<32x16xf32> -> vector<32x16xf32>
    %17 = vector.extract_strided_slice %16 {offsets = [0, 0], sizes = [16, 8], strides = [1, 1]} : vector<32x16xf32> to vector<16x8xf32>
    %18 = tpu.transpose %17, [1, 0] : vector<16x8xf32> -> vector<8x16xf32>
    %19 = vector.extract_strided_slice %16 {offsets = [0, 8], sizes = [16, 8], strides = [1, 1]} : vector<32x16xf32> to vector<16x8xf32>
    %20 = tpu.transpose %19, [1, 0] : vector<16x8xf32> -> vector<8x16xf32>
    %21 = vector.shape_cast %18 : vector<8x16xf32> to vector<8x16x1xf32>
    %22 = vector.shape_cast %20 : vector<8x16xf32> to vector<8x1x16xf32>
    %23 = vector.broadcast %21 : vector<8x16x1xf32> to vector<8x16x16xf32>
    %24 = vector.broadcast %22 : vector<8x1x16xf32> to vector<8x16x16xf32>
    %25 = arith.addf %23, %24 : vector<8x16x16xf32>
    %cst_17 = arith.constant 2.000000e-01 : f32
    %26 = vector.broadcast %cst_17 : f32 to vector<8x16x16xf32>
    %27 = arith.mulf %26, %25 : vector<8x16x16xf32>
    %28 = arith.maximumf %25, %27 : vector<8x16x16xf32>
    %29 = vector.broadcast %3 : vector<1x16x16xf32> to vector<8x16x16xf32>
    %30 = arith.addf %28, %29 : vector<8x16x16xf32>
    %cst_18 = arith.constant dense<0xFF800000> : vector<8x16xf32>
    %31 = vector.multi_reduction <maximumf>, %30, %cst_18 [2] : vector<8x16x16xf32> to vector<8x16xf32>
    %32 = vector.shape_cast %31 : vector<8x16xf32> to vector<8x16x1xf32>
    %33 = vector.broadcast %32 : vector<8x16x1xf32> to vector<8x16x16xf32>
    %34 = arith.subf %30, %33 : vector<8x16x16xf32>
    %35 = math.exp %34 : vector<8x16x16xf32>
    %cst_19 = arith.constant dense<0.000000e+00> : vector<8x16xf32>
    %36 = vector.multi_reduction <add>, %35, %cst_19 [2] : vector<8x16x16xf32> to vector<8x16xf32>
    %37 = vector.shape_cast %36 : vector<8x16xf32> to vector<8x16x1xf32>
    %38 = tpu.reciprocal %37 {approx = true} : vector<8x16x1xf32> -> vector<8x16x1xf32>
    %39 = vector.broadcast %38 : vector<8x16x1xf32> to vector<8x16x16xf32>
    %40 = arith.mulf %35, %39 : vector<8x16x16xf32>
    %41 = arith.truncf %40 : vector<8x16x16xf32> to vector<8x16x16xbf16>
    %42 = vector.extract_strided_slice %13 {offsets = [0, 0], sizes = [16, 32], strides = [1, 1]} : vector<32x32xbf16> to vector<16x32xbf16>
    %43 = vector.extract_strided_slice %41 {offsets = [0, 0, 0], sizes = [1, 16, 16], strides = [1, 1, 1]} : vector<8x16x16xbf16> to vector<1x16x16xbf16>
    %44 = vector.shape_cast %43 : vector<1x16x16xbf16> to vector<16x16xbf16>
    %45 = vector.extract_strided_slice %42 {offsets = [0, 0], sizes = [16, 4], strides = [1, 1]} : vector<16x32xbf16> to vector<16x4xbf16>
    %cst_20 = arith.constant dense<0.000000e+00> : vector<16x4xf32>
    %46 = tpu.matmul %44, %45, %cst_20 {dimension_numbers = #tpu.dot_dimension_numbers<[1], [0], [0], [1], [0, 0, 1, 1], [], []>} : vector<16x16xbf16>, vector<16x4xbf16>, vector<16x4xf32> -> vector<16x4xf32>
    %c0_21 = arith.constant 0 : index
    %c0_22 = arith.constant 0 : index
    %47 = vector.load %arg10[%c0_21, %c0_22] : memref<16x64xf32, #tpu.memory_space<vmem>>, vector<16x4xf32>
    tpu.vector_store %arg10[%c0_21, %c0_22], %46 {strides = array<i32>} : memref<16x64xf32, #tpu.memory_space<vmem>>, vector<16x4xf32>,
    %48 = vector.extract_strided_slice %41 {offsets = [1, 0, 0], sizes = [1, 16, 16], strides = [1, 1, 1]} : vector<8x16x16xbf16> to vector<1x16x16xbf16>
    %49 = vector.shape_cast %48 : vector<1x16x16xbf16> to vector<16x16xbf16>
    %50 = vector.extract_strided_slice %42 {offsets = [0, 4], sizes = [16, 4], strides = [1, 1]} : vector<16x32xbf16> to vector<16x4xbf16>
    %cst_23 = arith.constant dense<0.000000e+00> : vector<16x4xf32>
    %51 = tpu.matmul %49, %50, %cst_23 {dimension_numbers = #tpu.dot_dimension_numbers<[1], [0], [0], [1], [0, 0, 1, 1], [], []>} : vector<16x16xbf16>, vector<16x4xbf16>, vector<16x4xf32> -> vector<16x4xf32>
    %c0_24 = arith.constant 0 : index
    %c4 = arith.constant 4 : index
    %52 = vector.load %arg10[%c0_24, %c4] : memref<16x64xf32, #tpu.memory_space<vmem>>, vector<16x4xf32>
    tpu.vector_store %arg10[%c0_24, %c4], %51 {strides = array<i32>} : memref<16x64xf32, #tpu.memory_space<vmem>>, vector<16x4xf32>,
    %53 = vector.extract_strided_slice %41 {offsets = [2, 0, 0], sizes = [1, 16, 16], strides = [1, 1, 1]} : vector<8x16x16xbf16> to vector<1x16x16xbf16>
    %54 = vector.shape_cast %53 : vector<1x16x16xbf16> to vector<16x16xbf16>
    %55 = vector.extract_strided_slice %42 {offsets = [0, 8], sizes = [16, 4], strides = [1, 1]} : vector<16x32xbf16> to vector<16x4xbf16>
    %cst_25 = arith.constant dense<0.000000e+00> : vector<16x4xf32>
    %56 = tpu.matmul %54, %55, %cst_25 {dimension_numbers = #tpu.dot_dimension_numbers<[1], [0], [0], [1], [0, 0, 1, 1], [], []>} : vector<16x16xbf16>, vector<16x4xbf16>, vector<16x4xf32> -> vector<16x4xf32>
    %c0_26 = arith.constant 0 : index
    %c8 = arith.constant 8 : index
    %57 = vector.load %arg10[%c0_26, %c8] : memref<16x64xf32, #tpu.memory_space<vmem>>, vector<16x4xf32>
    tpu.vector_store %arg10[%c0_26, %c8], %56 {strides = array<i32>} : memref<16x64xf32, #tpu.memory_space<vmem>>, vector<16x4xf32>,
    %58 = vector.extract_strided_slice %41 {offsets = [3, 0, 0], sizes = [1, 16, 16], strides = [1, 1, 1]} : vector<8x16x16xbf16> to vector<1x16x16xbf16>
    %59 = vector.shape_cast %58 : vector<1x16x16xbf16> to vector<16x16xbf16>
    %60 = vector.extract_strided_slice %42 {offsets = [0, 12], sizes = [16, 4], strides = [1, 1]} : vector<16x32xbf16> to vector<16x4xbf16>
    %cst_27 = arith.constant dense<0.000000e+00> : vector<16x4xf32>
    %61 = tpu.matmul %59, %60, %cst_27 {dimension_numbers = #tpu.dot_dimension_numbers<[1], [0], [0], [1], [0, 0, 1, 1], [], []>} : vector<16x16xbf16>, vector<16x4xbf16>, vector<16x4xf32> -> vector<16x4xf32>
    %c0_28 = arith.constant 0 : index
    %c12 = arith.constant 12 : index
    %62 = vector.load %arg10[%c0_28, %c12] : memref<16x64xf32, #tpu.memory_space<vmem>>, vector<16x4xf32>
    tpu.vector_store %arg10[%c0_28, %c12], %61 {strides = array<i32>} : memref<16x64xf32, #tpu.memory_space<vmem>>, vector<16x4xf32>,
    %63 = vector.extract_strided_slice %41 {offsets = [4, 0, 0], sizes = [1, 16, 16], strides = [1, 1, 1]} : vector<8x16x16xbf16> to vector<1x16x16xbf16>
    %64 = vector.shape_cast %63 : vector<1x16x16xbf16> to vector<16x16xbf16>
    %65 = vector.extract_strided_slice %42 {offsets = [0, 16], sizes = [16, 4], strides = [1, 1]} : vector<16x32xbf16> to vector<16x4xbf16>
    %cst_29 = arith.constant dense<0.000000e+00> : vector<16x4xf32>
    %66 = tpu.matmul %64, %65, %cst_29 {dimension_numbers = #tpu.dot_dimension_numbers<[1], [0], [0], [1], [0, 0, 1, 1], [], []>} : vector<16x16xbf16>, vector<16x4xbf16>, vector<16x4xf32> -> vector<16x4xf32>
    %c0_30 = arith.constant 0 : index
    %c16 = arith.constant 16 : index
    %67 = vector.load %arg10[%c0_30, %c16] : memref<16x64xf32, #tpu.memory_space<vmem>>, vector<16x4xf32>
    tpu.vector_store %arg10[%c0_30, %c16], %66 {strides = array<i32>} : memref<16x64xf32, #tpu.memory_space<vmem>>, vector<16x4xf32>,
    %68 = vector.extract_strided_slice %41 {offsets = [5, 0, 0], sizes = [1, 16, 16], strides = [1, 1, 1]} : vector<8x16x16xbf16> to vector<1x16x16xbf16>
    %69 = vector.shape_cast %68 : vector<1x16x16xbf16> to vector<16x16xbf16>
    %70 = vector.extract_strided_slice %42 {offsets = [0, 20], sizes = [16, 4], strides = [1, 1]} : vector<16x32xbf16> to vector<16x4xbf16>
    %cst_31 = arith.constant dense<0.000000e+00> : vector<16x4xf32>
    %71 = tpu.matmul %69, %70, %cst_31 {dimension_numbers = #tpu.dot_dimension_numbers<[1], [0], [0], [1], [0, 0, 1, 1], [], []>} : vector<16x16xbf16>, vector<16x4xbf16>, vector<16x4xf32> -> vector<16x4xf32>
    %c0_32 = arith.constant 0 : index
    %c20 = arith.constant 20 : index
    %72 = vector.load %arg10[%c0_32, %c20] : memref<16x64xf32, #tpu.memory_space<vmem>>, vector<16x4xf32>
    tpu.vector_store %arg10[%c0_32, %c20], %71 {strides = array<i32>} : memref<16x64xf32, #tpu.memory_space<vmem>>, vector<16x4xf32>,
    %73 = vector.extract_strided_slice %41 {offsets = [6, 0, 0], sizes = [1, 16, 16], strides = [1, 1, 1]} : vector<8x16x16xbf16> to vector<1x16x16xbf16>
    %74 = vector.shape_cast %73 : vector<1x16x16xbf16> to vector<16x16xbf16>
    %75 = vector.extract_strided_slice %42 {offsets = [0, 24], sizes = [16, 4], strides = [1, 1]} : vector<16x32xbf16> to vector<16x4xbf16>
    %cst_33 = arith.constant dense<0.000000e+00> : vector<16x4xf32>
    %76 = tpu.matmul %74, %75, %cst_33 {dimension_numbers = #tpu.dot_dimension_numbers<[1], [0], [0], [1], [0, 0, 1, 1], [], []>} : vector<16x16xbf16>, vector<16x4xbf16>, vector<16x4xf32> -> vector<16x4xf32>
    %c0_34 = arith.constant 0 : index
    %c24 = arith.constant 24 : index
    %77 = vector.load %arg10[%c0_34, %c24] : memref<16x64xf32, #tpu.memory_space<vmem>>, vector<16x4xf32>
    tpu.vector_store %arg10[%c0_34, %c24], %76 {strides = array<i32>} : memref<16x64xf32, #tpu.memory_space<vmem>>, vector<16x4xf32>,
    %78 = vector.extract_strided_slice %41 {offsets = [7, 0, 0], sizes = [1, 16, 16], strides = [1, 1, 1]} : vector<8x16x16xbf16> to vector<1x16x16xbf16>
    %79 = vector.shape_cast %78 : vector<1x16x16xbf16> to vector<16x16xbf16>
    %80 = vector.extract_strided_slice %42 {offsets = [0, 28], sizes = [16, 4], strides = [1, 1]} : vector<16x32xbf16> to vector<16x4xbf16>
    %cst_35 = arith.constant dense<0.000000e+00> : vector<16x4xf32>
    %81 = tpu.matmul %79, %80, %cst_35 {dimension_numbers = #tpu.dot_dimension_numbers<[1], [0], [0], [1], [0, 0, 1, 1], [], []>} : vector<16x16xbf16>, vector<16x4xbf16>, vector<16x4xf32> -> vector<16x4xf32>
    %c0_36 = arith.constant 0 : index
    %c28 = arith.constant 28 : index
    %82 = vector.load %arg10[%c0_36, %c28] : memref<16x64xf32, #tpu.memory_space<vmem>>, vector<16x4xf32>
    tpu.vector_store %arg10[%c0_36, %c28], %81 {strides = array<i32>} : memref<16x64xf32, #tpu.memory_space<vmem>>, vector<16x4xf32>,
    %83 = vector.extract_strided_slice %14 {offsets = [0, 0], sizes = [16, 32], strides = [1, 1]} : vector<32x32xbf16> to vector<16x32xbf16>
    %cst_37 = arith.constant dense<0.000000e+00> : vector<16x32xf32>
    %84 = tpu.matmul %0, %83, %cst_37 {dimension_numbers = #tpu.dot_dimension_numbers<[1], [0], [0], [1], [0, 0, 1, 1], [], []>} : vector<16x16xbf16>, vector<16x32xbf16>, vector<16x32xf32> -> vector<16x32xf32>
    %85 = vector.broadcast %4 : vector<1x32xf32> to vector<16x32xf32>
    %86 = arith.addf %84, %85 : vector<16x32xf32>
    %c0_38 = arith.constant 0 : index
    %c32 = arith.constant 32 : index
    %87 = vector.load %arg10[%c0_38, %c32] : memref<16x64xf32, #tpu.memory_space<vmem>>, vector<16x32xf32>
    tpu.vector_store %arg10[%c0_38, %c32], %86 {strides = array<i32>} : memref<16x64xf32, #tpu.memory_space<vmem>>, vector<16x32xf32>,
    %c0_39 = arith.constant 0 : index
    %c0_40 = arith.constant 0 : index
    %88 = vector.load %arg10[%c0_39, %c0_40] : memref<16x64xf32, #tpu.memory_space<vmem>>, vector<16x64xf32>
    %c0_41 = arith.constant 0 : index
    %c0_42 = arith.constant 0 : index
    %89 = vector.load %arg9[%c0_41, %c0_42] : memref<32x64xf32, #tpu.memory_space<vmem>>, vector<16x64xf32>
    tpu.vector_store %arg9[%c0_41, %c0_42], %88 {strides = array<i32>} : memref<32x64xf32, #tpu.memory_space<vmem>>, vector<16x64xf32>,
    %90 = vector.extract_strided_slice %16 {offsets = [16, 0], sizes = [16, 8], strides = [1, 1]} : vector<32x16xf32> to vector<16x8xf32>
    %91 = tpu.transpose %90, [1, 0] : vector<16x8xf32> -> vector<8x16xf32>
    %92 = vector.extract_strided_slice %16 {offsets = [16, 8], sizes = [16, 8], strides = [1, 1]} : vector<32x16xf32> to vector<16x8xf32>
    %93 = tpu.transpose %92, [1, 0] : vector<16x8xf32> -> vector<8x16xf32>
    %94 = vector.shape_cast %91 : vector<8x16xf32> to vector<8x16x1xf32>
    %95 = vector.shape_cast %93 : vector<8x16xf32> to vector<8x1x16xf32>
    %96 = vector.broadcast %94 : vector<8x16x1xf32> to vector<8x16x16xf32>
    %97 = vector.broadcast %95 : vector<8x1x16xf32> to vector<8x16x16xf32>
    %98 = arith.addf %96, %97 : vector<8x16x16xf32>
    %cst_43 = arith.constant 2.000000e-01 : f32
    %99 = vector.broadcast %cst_43 : f32 to vector<8x16x16xf32>
    %100 = arith.mulf %99, %98 : vector<8x16x16xf32>
    %101 = arith.maximumf %98, %100 : vector<8x16x16xf32>
    %102 = vector.broadcast %3 : vector<1x16x16xf32> to vector<8x16x16xf32>
    %103 = arith.addf %101, %102 : vector<8x16x16xf32>
    %cst_44 = arith.constant dense<0xFF800000> : vector<8x16xf32>
    %104 = vector.multi_reduction <maximumf>, %103, %cst_44 [2] : vector<8x16x16xf32> to vector<8x16xf32>
    %105 = vector.shape_cast %104 : vector<8x16xf32> to vector<8x16x1xf32>
    %106 = vector.broadcast %105 : vector<8x16x1xf32> to vector<8x16x16xf32>
    %107 = arith.subf %103, %106 : vector<8x16x16xf32>
    %108 = math.exp %107 : vector<8x16x16xf32>
    %cst_45 = arith.constant dense<0.000000e+00> : vector<8x16xf32>
    %109 = vector.multi_reduction <add>, %108, %cst_45 [2] : vector<8x16x16xf32> to vector<8x16xf32>
    %110 = vector.shape_cast %109 : vector<8x16xf32> to vector<8x16x1xf32>
    %111 = tpu.reciprocal %110 {approx = true} : vector<8x16x1xf32> -> vector<8x16x1xf32>
    %112 = vector.broadcast %111 : vector<8x16x1xf32> to vector<8x16x16xf32>
    %113 = arith.mulf %108, %112 : vector<8x16x16xf32>
    %114 = arith.truncf %113 : vector<8x16x16xf32> to vector<8x16x16xbf16>
    %115 = vector.extract_strided_slice %13 {offsets = [16, 0], sizes = [16, 32], strides = [1, 1]} : vector<32x32xbf16> to vector<16x32xbf16>
    %116 = vector.extract_strided_slice %114 {offsets = [0, 0, 0], sizes = [1, 16, 16], strides = [1, 1, 1]} : vector<8x16x16xbf16> to vector<1x16x16xbf16>
    %117 = vector.shape_cast %116 : vector<1x16x16xbf16> to vector<16x16xbf16>
    %118 = vector.extract_strided_slice %115 {offsets = [0, 0], sizes = [16, 4], strides = [1, 1]} : vector<16x32xbf16> to vector<16x4xbf16>
    %cst_46 = arith.constant dense<0.000000e+00> : vector<16x4xf32>
    %119 = tpu.matmul %117, %118, %cst_46 {dimension_numbers = #tpu.dot_dimension_numbers<[1], [0], [0], [1], [0, 0, 1, 1], [], []>} : vector<16x16xbf16>, vector<16x4xbf16>, vector<16x4xf32> -> vector<16x4xf32>
    %c0_47 = arith.constant 0 : index
    %c0_48 = arith.constant 0 : index
    %120 = vector.load %arg10[%c0_47, %c0_48] : memref<16x64xf32, #tpu.memory_space<vmem>>, vector<16x4xf32>
    tpu.vector_store %arg10[%c0_47, %c0_48], %119 {strides = array<i32>} : memref<16x64xf32, #tpu.memory_space<vmem>>, vector<16x4xf32>,
    %121 = vector.extract_strided_slice %114 {offsets = [1, 0, 0], sizes = [1, 16, 16], strides = [1, 1, 1]} : vector<8x16x16xbf16> to vector<1x16x16xbf16>
    %122 = vector.shape_cast %121 : vector<1x16x16xbf16> to vector<16x16xbf16>
    %123 = vector.extract_strided_slice %115 {offsets = [0, 4], sizes = [16, 4], strides = [1, 1]} : vector<16x32xbf16> to vector<16x4xbf16>
    %cst_49 = arith.constant dense<0.000000e+00> : vector<16x4xf32>
    %124 = tpu.matmul %122, %123, %cst_49 {dimension_numbers = #tpu.dot_dimension_numbers<[1], [0], [0], [1], [0, 0, 1, 1], [], []>} : vector<16x16xbf16>, vector<16x4xbf16>, vector<16x4xf32> -> vector<16x4xf32>
    %c0_50 = arith.constant 0 : index
    %c4_51 = arith.constant 4 : index
    %125 = vector.load %arg10[%c0_50, %c4_51] : memref<16x64xf32, #tpu.memory_space<vmem>>, vector<16x4xf32>
    tpu.vector_store %arg10[%c0_50, %c4_51], %124 {strides = array<i32>} : memref<16x64xf32, #tpu.memory_space<vmem>>, vector<16x4xf32>,
    %126 = vector.extract_strided_slice %114 {offsets = [2, 0, 0], sizes = [1, 16, 16], strides = [1, 1, 1]} : vector<8x16x16xbf16> to vector<1x16x16xbf16>
    %127 = vector.shape_cast %126 : vector<1x16x16xbf16> to vector<16x16xbf16>
    %128 = vector.extract_strided_slice %115 {offsets = [0, 8], sizes = [16, 4], strides = [1, 1]} : vector<16x32xbf16> to vector<16x4xbf16>
    %cst_52 = arith.constant dense<0.000000e+00> : vector<16x4xf32>
    %129 = tpu.matmul %127, %128, %cst_52 {dimension_numbers = #tpu.dot_dimension_numbers<[1], [0], [0], [1], [0, 0, 1, 1], [], []>} : vector<16x16xbf16>, vector<16x4xbf16>, vector<16x4xf32> -> vector<16x4xf32>
    %c0_53 = arith.constant 0 : index
    %c8_54 = arith.constant 8 : index
    %130 = vector.load %arg10[%c0_53, %c8_54] : memref<16x64xf32, #tpu.memory_space<vmem>>, vector<16x4xf32>
    tpu.vector_store %arg10[%c0_53, %c8_54], %129 {strides = array<i32>} : memref<16x64xf32, #tpu.memory_space<vmem>>, vector<16x4xf32>,
    %131 = vector.extract_strided_slice %114 {offsets = [3, 0, 0], sizes = [1, 16, 16], strides = [1, 1, 1]} : vector<8x16x16xbf16> to vector<1x16x16xbf16>
    %132 = vector.shape_cast %131 : vector<1x16x16xbf16> to vector<16x16xbf16>
    %133 = vector.extract_strided_slice %115 {offsets = [0, 12], sizes = [16, 4], strides = [1, 1]} : vector<16x32xbf16> to vector<16x4xbf16>
    %cst_55 = arith.constant dense<0.000000e+00> : vector<16x4xf32>
    %134 = tpu.matmul %132, %133, %cst_55 {dimension_numbers = #tpu.dot_dimension_numbers<[1], [0], [0], [1], [0, 0, 1, 1], [], []>} : vector<16x16xbf16>, vector<16x4xbf16>, vector<16x4xf32> -> vector<16x4xf32>
    %c0_56 = arith.constant 0 : index
    %c12_57 = arith.constant 12 : index
    %135 = vector.load %arg10[%c0_56, %c12_57] : memref<16x64xf32, #tpu.memory_space<vmem>>, vector<16x4xf32>
    tpu.vector_store %arg10[%c0_56, %c12_57], %134 {strides = array<i32>} : memref<16x64xf32, #tpu.memory_space<vmem>>, vector<16x4xf32>,
    %136 = vector.extract_strided_slice %114 {offsets = [4, 0, 0], sizes = [1, 16, 16], strides = [1, 1, 1]} : vector<8x16x16xbf16> to vector<1x16x16xbf16>
    %137 = vector.shape_cast %136 : vector<1x16x16xbf16> to vector<16x16xbf16>
    %138 = vector.extract_strided_slice %115 {offsets = [0, 16], sizes = [16, 4], strides = [1, 1]} : vector<16x32xbf16> to vector<16x4xbf16>
    %cst_58 = arith.constant dense<0.000000e+00> : vector<16x4xf32>
    %139 = tpu.matmul %137, %138, %cst_58 {dimension_numbers = #tpu.dot_dimension_numbers<[1], [0], [0], [1], [0, 0, 1, 1], [], []>} : vector<16x16xbf16>, vector<16x4xbf16>, vector<16x4xf32> -> vector<16x4xf32>
    %c0_59 = arith.constant 0 : index
    %c16_60 = arith.constant 16 : index
    %140 = vector.load %arg10[%c0_59, %c16_60] : memref<16x64xf32, #tpu.memory_space<vmem>>, vector<16x4xf32>
    tpu.vector_store %arg10[%c0_59, %c16_60], %139 {strides = array<i32>} : memref<16x64xf32, #tpu.memory_space<vmem>>, vector<16x4xf32>,
    %141 = vector.extract_strided_slice %114 {offsets = [5, 0, 0], sizes = [1, 16, 16], strides = [1, 1, 1]} : vector<8x16x16xbf16> to vector<1x16x16xbf16>
    %142 = vector.shape_cast %141 : vector<1x16x16xbf16> to vector<16x16xbf16>
    %143 = vector.extract_strided_slice %115 {offsets = [0, 20], sizes = [16, 4], strides = [1, 1]} : vector<16x32xbf16> to vector<16x4xbf16>
    %cst_61 = arith.constant dense<0.000000e+00> : vector<16x4xf32>
    %144 = tpu.matmul %142, %143, %cst_61 {dimension_numbers = #tpu.dot_dimension_numbers<[1], [0], [0], [1], [0, 0, 1, 1], [], []>} : vector<16x16xbf16>, vector<16x4xbf16>, vector<16x4xf32> -> vector<16x4xf32>
    %c0_62 = arith.constant 0 : index
    %c20_63 = arith.constant 20 : index
    %145 = vector.load %arg10[%c0_62, %c20_63] : memref<16x64xf32, #tpu.memory_space<vmem>>, vector<16x4xf32>
    tpu.vector_store %arg10[%c0_62, %c20_63], %144 {strides = array<i32>} : memref<16x64xf32, #tpu.memory_space<vmem>>, vector<16x4xf32>,
    %146 = vector.extract_strided_slice %114 {offsets = [6, 0, 0], sizes = [1, 16, 16], strides = [1, 1, 1]} : vector<8x16x16xbf16> to vector<1x16x16xbf16>
    %147 = vector.shape_cast %146 : vector<1x16x16xbf16> to vector<16x16xbf16>
    %148 = vector.extract_strided_slice %115 {offsets = [0, 24], sizes = [16, 4], strides = [1, 1]} : vector<16x32xbf16> to vector<16x4xbf16>
    %cst_64 = arith.constant dense<0.000000e+00> : vector<16x4xf32>
    %149 = tpu.matmul %147, %148, %cst_64 {dimension_numbers = #tpu.dot_dimension_numbers<[1], [0], [0], [1], [0, 0, 1, 1], [], []>} : vector<16x16xbf16>, vector<16x4xbf16>, vector<16x4xf32> -> vector<16x4xf32>
    %c0_65 = arith.constant 0 : index
    %c24_66 = arith.constant 24 : index
    %150 = vector.load %arg10[%c0_65, %c24_66] : memref<16x64xf32, #tpu.memory_space<vmem>>, vector<16x4xf32>
    tpu.vector_store %arg10[%c0_65, %c24_66], %149 {strides = array<i32>} : memref<16x64xf32, #tpu.memory_space<vmem>>, vector<16x4xf32>,
    %151 = vector.extract_strided_slice %114 {offsets = [7, 0, 0], sizes = [1, 16, 16], strides = [1, 1, 1]} : vector<8x16x16xbf16> to vector<1x16x16xbf16>
    %152 = vector.shape_cast %151 : vector<1x16x16xbf16> to vector<16x16xbf16>
    %153 = vector.extract_strided_slice %115 {offsets = [0, 28], sizes = [16, 4], strides = [1, 1]} : vector<16x32xbf16> to vector<16x4xbf16>
    %cst_67 = arith.constant dense<0.000000e+00> : vector<16x4xf32>
    %154 = tpu.matmul %152, %153, %cst_67 {dimension_numbers = #tpu.dot_dimension_numbers<[1], [0], [0], [1], [0, 0, 1, 1], [], []>} : vector<16x16xbf16>, vector<16x4xbf16>, vector<16x4xf32> -> vector<16x4xf32>
    %c0_68 = arith.constant 0 : index
    %c28_69 = arith.constant 28 : index
    %155 = vector.load %arg10[%c0_68, %c28_69] : memref<16x64xf32, #tpu.memory_space<vmem>>, vector<16x4xf32>
    tpu.vector_store %arg10[%c0_68, %c28_69], %154 {strides = array<i32>} : memref<16x64xf32, #tpu.memory_space<vmem>>, vector<16x4xf32>,
    %156 = vector.extract_strided_slice %14 {offsets = [16, 0], sizes = [16, 32], strides = [1, 1]} : vector<32x32xbf16> to vector<16x32xbf16>
    %cst_70 = arith.constant dense<0.000000e+00> : vector<16x32xf32>
    %157 = tpu.matmul %0, %156, %cst_70 {dimension_numbers = #tpu.dot_dimension_numbers<[1], [0], [0], [1], [0, 0, 1, 1], [], []>} : vector<16x16xbf16>, vector<16x32xbf16>, vector<16x32xf32> -> vector<16x32xf32>
    %158 = vector.broadcast %4 : vector<1x32xf32> to vector<16x32xf32>
    %159 = arith.addf %157, %158 : vector<16x32xf32>
    %c0_71 = arith.constant 0 : index
    %c32_72 = arith.constant 32 : index
    %160 = vector.load %arg10[%c0_71, %c32_72] : memref<16x64xf32, #tpu.memory_space<vmem>>, vector<16x32xf32>
    tpu.vector_store %arg10[%c0_71, %c32_72], %159 {strides = array<i32>} : memref<16x64xf32, #tpu.memory_space<vmem>>, vector<16x32xf32>,
    %c0_73 = arith.constant 0 : index
    %c0_74 = arith.constant 0 : index
    %161 = vector.load %arg10[%c0_73, %c0_74] : memref<16x64xf32, #tpu.memory_space<vmem>>, vector<16x64xf32>
    %c16_75 = arith.constant 16 : index
    %c0_76 = arith.constant 0 : index
    %162 = vector.load %arg9[%c16_75, %c0_76] : memref<32x64xf32, #tpu.memory_space<vmem>>, vector<16x64xf32>
    tpu.vector_store %arg9[%c16_75, %c0_76], %161 {strides = array<i32>} : memref<32x64xf32, #tpu.memory_space<vmem>>, vector<16x64xf32>,
    return
  }
  func.func @transform_0(%arg0: i32) -> (i32, i32) {
    %c0_i32 = arith.constant 0 : i32
    %c0_i32_0 = arith.constant 0 : i32
    return %arg0, %c0_i32 : i32, i32
  }
  func.func @transform_1(%arg0: i32) -> (i32, i32) {
    %c0_i32 = arith.constant 0 : i32
    %c0_i32_0 = arith.constant 0 : i32
    return %arg0, %c0_i32 : i32, i32
  }
  func.func @transform_2(%arg0: i32) -> (i32, i32) {
    %c0_i32 = arith.constant 0 : i32
    %c0_i32_0 = arith.constant 0 : i32
    %c0_i32_1 = arith.constant 0 : i32
    return %c0_i32, %c0_i32_0 : i32, i32
  }
  func.func @transform_3(%arg0: i32) -> (i32, i32) {
    %c0_i32 = arith.constant 0 : i32
    %c0_i32_0 = arith.constant 0 : i32
    %c0_i32_1 = arith.constant 0 : i32
    return %c0_i32, %c0_i32_0 : i32, i32
  }
  func.func @transform_4(%arg0: i32) -> (i32, i32) {
    %c0_i32 = arith.constant 0 : i32
    %c0_i32_0 = arith.constant 0 : i32
    %c0_i32_1 = arith.constant 0 : i32
    return %c0_i32, %c0_i32_0 : i32, i32
  }
  func.func @transform_5(%arg0: i32) -> (i32, i32) {
    %c0_i32 = arith.constant 0 : i32
    %c0_i32_0 = arith.constant 0 : i32
    %c0_i32_1 = arith.constant 0 : i32
    return %c0_i32, %c0_i32_0 : i32, i32
  }
  func.func @transform_6(%arg0: i32) -> (i32, i32) {
    %c0_i32 = arith.constant 0 : i32
    %c0_i32_0 = arith.constant 0 : i32
    %c0_i32_1 = arith.constant 0 : i32
    return %c0_i32, %c0_i32_0 : i32, i32
  }
  func.func @transform_7(%arg0: i32) -> (i32, i32) {
    %c0_i32 = arith.constant 0 : i32
    %c0_i32_0 = arith.constant 0 : i32
    %c0_i32_1 = arith.constant 0 : i32
    return %c0_i32, %c0_i32_0 : i32, i32
  }
  func.func @transform_8(%arg0: i32) -> (i32, i32) {
    %c0_i32 = arith.constant 0 : i32
    %c0_i32_0 = arith.constant 0 : i32
    return %arg0, %c0_i32 : i32, i32
  }
}

</mosaic_0001>

<llo_original>
// kernel: tpu_custom_call.1
$region0: #{tpu_custom_call.1}
  #allocation0 [shape = 'u32[]', space=smem, size = 0x4, offset = 0x4, fixed_abs, tag = 'smem constant byte address 0x4 - core index']
  #allocation1 [shape = 'u32[72,128]{1,0:T(1,128)}', space=vmem, size = 0x9000, scoped, tag = 'internal scratch']
  #allocation2 [shape = 'f32[16,64]{1,0:T(8,128)}', space=vmem, size = 0x2000, scoped, tag = 'scratch operand']
  %s0 = inlined_call_operand.vmem [shape: bf16[64,4], index: 0, kind: input, shape index: {}]
  %s1 = inlined_call_operand.vmem [shape: bf16[64,32], index: 1, kind: input, shape index: {}]
  %s2 = inlined_call_operand.vmem [shape: bf16[16,16], index: 2, kind: input, shape index: {}]
  %s3 = inlined_call_operand.vmem [shape: bf16[16,16], index: 3, kind: input, shape index: {}]
  %s4 = inlined_call_operand.vmem [shape: bf16[4,64], index: 4, kind: input, shape index: {}]
  %s5 = inlined_call_operand.vmem [shape: bf16[32,64], index: 5, kind: input, shape index: {}]
  %s6 = inlined_call_operand.vmem [shape: bf16[32,16], index: 6, kind: input, shape index: {}]
  %s7 = inlined_call_operand.vmem [shape: f32[1,32], index: 7, kind: input, shape index: {}]
  %s8 = inlined_call_operand.hbm [shape: f32[64,64], index: 8, kind: output, shape index: {}]
  %s9 = sld [smem:[#allocation0]]
  $region65: #{tpu_custom_call.1} parent=0
    _
  %s11 = ssub.s32 1, %s9
  %s12 = scalar_select 0, %s11, %s9
  $region1: #{tpu_custom_call.1} parent=0
    #allocation3 [shape = 'u8[32768]{0}', space=vmem, size = 0x8000, scoped, tag = 'output window, operand 0']
    #allocation4 [shape = 's32[2]{0}', space=sflag, size = 0x8, scoped, tag = 'scoped memory for tpu_custom_call.1']
    %13 = vsyncpa [#allocation4], 0
    %s14 = scalar_lea.sflag [#allocation4], 1
    %15 = vsyncpa %s14, 0
    loop: start=0, step=1, limit=4
    $region2: #{tpu_custom_call.1} parent=1 // loop_pre_header
      _
    $region3: #{tpu_custom_call.1} parent=1 // loop_header
      %s17 = sphi 0, %s21
      %p18 = scmp.ge.s32.totalorder %s17, 4
      %s27 = sphi 0, %s29
      %s30 = sphi 0, %s27
      %s31 = sphi 0, %s30
      %s47 = sphi 0, %s31
      %s53 = sphi 0, %s55
      %s56 = sphi 0, %s53
      %s57 = sphi 0, %s56
      %s73 = sphi 0, %s57
      %s77 = sphi 0, %s77
      %s79 = sphi 0, %s77
      %s80 = sphi 0, %s79
      %s94 = sphi 0, %s80
      %s98 = sphi 0, %s98
      %s100 = sphi 0, %s98
      %s101 = sphi 0, %s100
      %s115 = sphi 0, %s101
      %s119 = sphi 0, %s119
      %s121 = sphi 0, %s119
      %s122 = sphi 0, %s121
      %s136 = sphi 0, %s122
      %s140 = sphi 0, %s140
      %s142 = sphi 0, %s140
      %s143 = sphi 0, %s142
      %s157 = sphi 0, %s143
      %s161 = sphi 0, %s161
      %s163 = sphi 0, %s161
      %s164 = sphi 0, %s163
      %s178 = sphi 0, %s164
      %s182 = sphi 0, %s182
      %s184 = sphi 0, %s182
      %s185 = sphi 0, %s184
      %s199 = sphi 0, %s185
      %s205 = sphi 0, %s207
      %s208 = sphi 0, %s205
      %s209 = sphi 0, %s208
      %s225 = sphi 0, %s209
    $region4: #{tpu_custom_call.1} parent=1 // loop_header_branch
      %20 = sbr.rel (%p18) target = $region8
    $region5: #{tpu_custom_call.1} parent=1 // loop_body
      %s22 = ssub.s32 %s17, 1
      %s23 = ssub.s32 %s17, 2
      %s24 = sadd.s32 %s17, 1
      %s25 = ssub.s32 %s17, %s24
      %p26 = scmp.eq.s32.totalorder %s25, 0
      %s28 = sadd.s32 %s27, 1
      %s29 = scalar_select %p26, %s27, %s28
      %p32 = pneg %p26
      %p33 = scmp.eq.s32.totalorder %s17, 1
      %p34 = por %p32, %p33
      %p35 = scmp.ne.s32.totalorder %s27, %s30
      %p36 = scmp.eq.s32.totalorder %s17, 0
      %p37 = por %p35, %p36
      %p38 = scmp.ne.s32.totalorder %s27, %s30
      %p39 = scmp.eq.s32.totalorder %s22, 1
      %p40 = por %p38, %p39
      %p41 = scmp.ne.s32.totalorder %s30, %s31
      %p42 = scmp.eq.s32.totalorder %s22, 0
      %p43 = por %p41, %p42
      %p44 = scmp.ne.s32.totalorder %s30, %s31
      %p45 = scmp.eq.s32.totalorder %s23, 1
      %p46 = por %p44, %p45
      %p48 = scmp.ne.s32.totalorder %s31, %s47
      %p49 = scmp.eq.s32.totalorder %s23, 0
      %p50 = por %p48, %p49
      %s51 = ssub.s32 %s17, %s24
      %p52 = scmp.eq.s32.totalorder %s51, 0
      %s54 = sadd.s32 %s53, 1
      %s55 = scalar_select %p52, %s53, %s54
      %p58 = pneg %p52
      %p59 = scmp.eq.s32.totalorder %s17, 1
      %p60 = por %p58, %p59
      %p61 = scmp.ne.s32.totalorder %s53, %s56
      %p62 = scmp.eq.s32.totalorder %s17, 0
      %p63 = por %p61, %p62
      %p64 = scmp.ne.s32.totalorder %s53, %s56
      %p65 = scmp.eq.s32.totalorder %s22, 1
      %p66 = por %p64, %p65
      %p67 = scmp.ne.s32.totalorder %s56, %s57
      %p68 = scmp.eq.s32.totalorder %s22, 0
      %p69 = por %p67, %p68
      %p70 = scmp.ne.s32.totalorder %s56, %s57
      %p71 = scmp.eq.s32.totalorder %s23, 1
      %p72 = por %p70, %p71
      %p74 = scmp.ne.s32.totalorder %s57, %s73
      %p75 = scmp.eq.s32.totalorder %s23, 0
      %p76 = por %p74, %p75
      %s78 = sadd.s32 %s77, 1
      %p81 = scmp.eq.s32.totalorder %s17, 1
      %p82 = scmp.ne.s32.totalorder %s77, %s79
      %p83 = scmp.eq.s32.totalorder %s17, 0
      %p84 = por %p82, %p83
      %p85 = scmp.ne.s32.totalorder %s77, %s79
      %p86 = scmp.eq.s32.totalorder %s22, 1
      %p87 = por %p85, %p86
      %p88 = scmp.ne.s32.totalorder %s79, %s80
      %p89 = scmp.eq.s32.totalorder %s22, 0
      %p90 = por %p88, %p89
      %p91 = scmp.ne.s32.totalorder %s79, %s80
      %p92 = scmp.eq.s32.totalorder %s23, 1
      %p93 = por %p91, %p92
      %p95 = scmp.ne.s32.totalorder %s80, %s94
      %p96 = scmp.eq.s32.totalorder %s23, 0
      %p97 = por %p95, %p96
      %s99 = sadd.s32 %s98, 1
      %p102 = scmp.eq.s32.totalorder %s17, 1
      %p103 = scmp.ne.s32.totalorder %s98, %s100
      %p104 = scmp.eq.s32.totalorder %s17, 0
      %p105 = por %p103, %p104
      %p106 = scmp.ne.s32.totalorder %s98, %s100
      %p107 = scmp.eq.s32.totalorder %s22, 1
      %p108 = por %p106, %p107
      %p109 = scmp.ne.s32.totalorder %s100, %s101
      %p110 = scmp.eq.s32.totalorder %s22, 0
      %p111 = por %p109, %p110
      %p112 = scmp.ne.s32.totalorder %s100, %s101
      %p113 = scmp.eq.s32.totalorder %s23, 1
      %p114 = por %p112, %p113
      %p116 = scmp.ne.s32.totalorder %s101, %s115
      %p117 = scmp.eq.s32.totalorder %s23, 0
      %p118 = por %p116, %p117
      %s120 = sadd.s32 %s119, 1
      %p123 = scmp.eq.s32.totalorder %s17, 1
      %p124 = scmp.ne.s32.totalorder %s119, %s121
      %p125 = scmp.eq.s32.totalorder %s17, 0
      %p126 = por %p124, %p125
      %p127 = scmp.ne.s32.totalorder %s119, %s121
      %p128 = scmp.eq.s32.totalorder %s22, 1
      %p129 = por %p127, %p128
      %p130 = scmp.ne.s32.totalorder %s121, %s122
      %p131 = scmp.eq.s32.totalorder %s22, 0
      %p132 = por %p130, %p131
      %p133 = scmp.ne.s32.totalorder %s121, %s122
      %p134 = scmp.eq.s32.totalorder %s23, 1
      %p135 = por %p133, %p134
      %p137 = scmp.ne.s32.totalorder %s122, %s136
      %p138 = scmp.eq.s32.totalorder %s23, 0
      %p139 = por %p137, %p138
      %s141 = sadd.s32 %s140, 1
      %p144 = scmp.eq.s32.totalorder %s17, 1
      %p145 = scmp.ne.s32.totalorder %s140, %s142
      %p146 = scmp.eq.s32.totalorder %s17, 0
      %p147 = por %p145, %p146
      %p148 = scmp.ne.s32.totalorder %s140, %s142
      %p149 = scmp.eq.s32.totalorder %s22, 1
      %p150 = por %p148, %p149
      %p151 = scmp.ne.s32.totalorder %s142, %s143
      %p152 = scmp.eq.s32.totalorder %s22, 0
      %p153 = por %p151, %p152
      %p154 = scmp.ne.s32.totalorder %s142, %s143
      %p155 = scmp.eq.s32.totalorder %s23, 1
      %p156 = por %p154, %p155
      %p158 = scmp.ne.s32.totalorder %s143, %s157
      %p159 = scmp.eq.s32.totalorder %s23, 0
      %p160 = por %p158, %p159
      %s162 = sadd.s32 %s161, 1
      %p165 = scmp.eq.s32.totalorder %s17, 1
      %p166 = scmp.ne.s32.totalorder %s161, %s163
      %p167 = scmp.eq.s32.totalorder %s17, 0
      %p168 = por %p166, %p167
      %p169 = scmp.ne.s32.totalorder %s161, %s163
      %p170 = scmp.eq.s32.totalorder %s22, 1
      %p171 = por %p169, %p170
      %p172 = scmp.ne.s32.totalorder %s163, %s164
      %p173 = scmp.eq.s32.totalorder %s22, 0
      %p174 = por %p172, %p173
      %p175 = scmp.ne.s32.totalorder %s163, %s164
      %p176 = scmp.eq.s32.totalorder %s23, 1
      %p177 = por %p175, %p176
      %p179 = scmp.ne.s32.totalorder %s164, %s178
      %p180 = scmp.eq.s32.totalorder %s23, 0
      %p181 = por %p179, %p180
      %s183 = sadd.s32 %s182, 1
      %p186 = scmp.eq.s32.totalorder %s17, 1
      %p187 = scmp.ne.s32.totalorder %s182, %s184
      %p188 = scmp.eq.s32.totalorder %s17, 0
      %p189 = por %p187, %p188
      %p190 = scmp.ne.s32.totalorder %s182, %s184
      %p191 = scmp.eq.s32.totalorder %s22, 1
      %p192 = por %p190, %p191
      %p193 = scmp.ne.s32.totalorder %s184, %s185
      %p194 = scmp.eq.s32.totalorder %s22, 0
      %p195 = por %p193, %p194
      %p196 = scmp.ne.s32.totalorder %s184, %s185
      %p197 = scmp.eq.s32.totalorder %s23, 1
      %p198 = por %p196, %p197
      %p200 = scmp.ne.s32.totalorder %s185, %s199
      %p201 = scmp.eq.s32.totalorder %s23, 0
      %p202 = por %p200, %p201
      %s203 = ssub.s32 %s17, %s24
      %p204 = scmp.eq.s32.totalorder %s203, 0
      %s206 = sadd.s32 %s205, 1
      %s207 = scalar_select %p204, %s205, %s206
      %p210 = pneg %p204
      %p211 = scmp.eq.s32.totalorder %s17, 1
      %p212 = por %p210, %p211
      %p213 = scmp.ne.s32.totalorder %s205, %s208
      %p214 = scmp.eq.s32.totalorder %s17, 0
      %p215 = por %p213, %p214
      %p216 = scmp.ne.s32.totalorder %s205, %s208
      %p217 = scmp.eq.s32.totalorder %s22, 1
      %p218 = por %p216, %p217
      %p219 = scmp.ne.s32.totalorder %s208, %s209
      %p220 = scmp.eq.s32.totalorder %s22, 0
      %p221 = por %p219, %p220
      %p222 = scmp.ne.s32.totalorder %s208, %s209
      %p223 = scmp.eq.s32.totalorder %s23, 1
      %p224 = por %p222, %p223
      %p226 = scmp.ne.s32.totalorder %s209, %s225
      %p227 = scmp.eq.s32.totalorder %s23, 0
      %p228 = por %p226, %p227
      %p229 = scmp.le.s32.totalorder 1, %s17
      %p230 = scmp.lt.s32.totalorder %s17, 3
      %p231 = pnand %p229, %p230
      %p232 = pneg %p231
      // Predicated region
      $region9: #{tpu_custom_call.1} parent=5 // pred_check
        _
      $region10: #{tpu_custom_call.1} parent=5 // pred_check_branch
        %234 = sbr.rel (%p231) target = $region12
      $region11: #{tpu_custom_call.1} parent=5 // pred_region
        %s235 = ssub.s32 %s17, 1
        // Predicated region
        $region13: #{tpu_custom_call.1} parent=11 // pred_check
          %p236 = pneg %p90
        $region14: #{tpu_custom_call.1} parent=11 // pred_check_branch
          %238 = sbr.rel (%p236) target = $region16
        $region15: #{tpu_custom_call.1} parent=11 // pred_region
          _
        $region16: #{tpu_custom_call.1} parent=11 // pred_fallthru
          _
        // Predicated region
        $region17: #{tpu_custom_call.1} parent=11 // pred_check
          %p239 = pneg %p111
        $region18: #{tpu_custom_call.1} parent=11 // pred_check_branch
          %241 = sbr.rel (%p239) target = $region20
        $region19: #{tpu_custom_call.1} parent=11 // pred_region
          _
        $region20: #{tpu_custom_call.1} parent=11 // pred_fallthru
          _
        // Predicated region
        $region21: #{tpu_custom_call.1} parent=11 // pred_check
          %p242 = pneg %p132
        $region22: #{tpu_custom_call.1} parent=11 // pred_check_branch
          %244 = sbr.rel (%p242) target = $region24
        $region23: #{tpu_custom_call.1} parent=11 // pred_region
          _
        $region24: #{tpu_custom_call.1} parent=11 // pred_fallthru
          _
        // Predicated region
        $region25: #{tpu_custom_call.1} parent=11 // pred_check
          %p245 = pneg %p153
        $region26: #{tpu_custom_call.1} parent=11 // pred_check_branch
          %247 = sbr.rel (%p245) target = $region28
        $region27: #{tpu_custom_call.1} parent=11 // pred_region
          _
        $region28: #{tpu_custom_call.1} parent=11 // pred_fallthru
          _
        // Predicated region
        $region29: #{tpu_custom_call.1} parent=11 // pred_check
          %p248 = pneg %p174
        $region30: #{tpu_custom_call.1} parent=11 // pred_check_branch
          %250 = sbr.rel (%p248) target = $region32
        $region31: #{tpu_custom_call.1} parent=11 // pred_region
          _
        $region32: #{tpu_custom_call.1} parent=11 // pred_fallthru
          _
        // Predicated region
        $region33: #{tpu_custom_call.1} parent=11 // pred_check
          %p251 = pneg %p195
        $region34: #{tpu_custom_call.1} parent=11 // pred_check_branch
          %253 = sbr.rel (%p251) target = $region36
        $region35: #{tpu_custom_call.1} parent=11 // pred_region
          _
        $region36: #{tpu_custom_call.1} parent=11 // pred_fallthru
          _
      $region12: #{tpu_custom_call.1} parent=5 // pred_fallthru
        _
      %p254 = scmp.lt.s32.totalorder %s17, 2
      // Predicated region
      $region37: #{tpu_custom_call.1} parent=5 // pred_check
        %p255 = pneg %p254
      $region38: #{tpu_custom_call.1} parent=5 // pred_check_branch
        %257 = sbr.rel (%p255) target = $region40
      $region39: #{tpu_custom_call.1} parent=5 // pred_region
        // Predicated region
        $region41: #{tpu_custom_call.1} parent=39 // pred_check
          %p258 = pneg %p37
        $region42: #{tpu_custom_call.1} parent=39 // pred_check_branch
          %260 = sbr.rel (%p258) target = $region44
        $region43: #{tpu_custom_call.1} parent=39 // pred_region
          %s261 = smul.u32 4, %s17
          %p262 = scmp.lt.s32.totalorder %s261, 7
          %s263 = scalar_select %p262, %s261, 7
          %s264 = smul.addr %s263, 4
          %s265 = scalar_lea.vmem %s0, %s264
          %s266 = smul.u32 4, %s17
        $region44: #{tpu_custom_call.1} parent=39 // pred_fallthru
          _
        // Predicated region
        $region45: #{tpu_custom_call.1} parent=39 // pred_check
          %p267 = pneg %p63
        $region46: #{tpu_custom_call.1} parent=39 // pred_check_branch
          %269 = sbr.rel (%p267) target = $region48
        $region47: #{tpu_custom_call.1} parent=39 // pred_region
          %s270 = smul.u32 4, %s17
          %p271 = scmp.lt.s32.totalorder %s270, 7
          %s272 = scalar_select %p271, %s270, 7
          %s273 = smul.addr %s272, 4
          %s274 = scalar_lea.vmem %s1, %s273
          %s275 = smul.u32 4, %s17
        $region48: #{tpu_custom_call.1} parent=39 // pred_fallthru
          _
      $region40: #{tpu_custom_call.1} parent=5 // pred_fallthru
        _
      %p276 = scmp.le.s32.totalorder 1, %s17
      %p277 = scmp.lt.s32.totalorder %s17, 3
      %p278 = pnand %p276, %p277
      %p279 = pneg %p278
      // Predicated region
      $region49: #{tpu_custom_call.1} parent=5 // pred_check
        _
      $region50: #{tpu_custom_call.1} parent=5 // pred_check_branch
        %281 = sbr.rel (%p278) target = $region52
      $region51: #{tpu_custom_call.1} parent=5 // pred_region
        %s282 = ssub.s32 %s17, 1
        %s283 = smul.u32 4, %s22
        %p284 = scmp.lt.s32.totalorder %s283, 7
        %s285 = scalar_select %p284, %s283, 7
        %s286 = smul.addr %s285, 4
        %s287 = scalar_lea.vmem %s0, %s286
        %p288 = pneg %p43
        %p289 = pneg %p40
        %s290 = smul.u32 4, %s22
        %p291 = scmp.lt.s32.totalorder %s290, 7
        %s292 = scalar_select %p291, %s290, 7
        %s293 = smul.addr %s292, 4
        %s294 = scalar_lea.vmem %s1, %s293
        %p295 = pneg %p69
        %p296 = pneg %p66
        %p297 = pneg %p90
        %p298 = pneg %p87
        %p299 = pneg %p111
        %p300 = pneg %p108
        %p301 = pneg %p132
        %p302 = pneg %p129
        %p303 = pneg %p153
        %p304 = pneg %p150
        %p305 = pneg %p174
        %p306 = pneg %p171
        %p307 = pneg %p195
        %p308 = pneg %p192
        %p309 = pneg %p221
        %p310 = pneg %p218
        %s311 = sand.u32 %s208, 1
        %s312 = scalar_lea.sflag [#allocation4], %s311
        %s313 = sand.u32 %s208, 1
        %s314 = smul.addr %s313, 32
        %s315 = scalar_lea.vmem [#allocation3], %s314
        %s316 = smul.u32 4, %s22
        %p317 = scmp.lt.s32.totalorder %s316, 7
        %s318 = scalar_select %p317, %s316, 7
        %s319 = smul.addr %s318, 4
        %s320 = scalar_lea.vmem %s0, %s319
        %s321 = smul.u32 4, %s22
        %s322 = smul.u32 4, %s22
        %p323 = scmp.lt.s32.totalorder %s322, 7
        %s324 = scalar_select %p323, %s322, 7
        %s325 = smul.addr %s324, 4
        %s326 = scalar_lea.vmem %s1, %s325
        %s327 = smul.u32 4, %s22
        %s328 = smul.u32 4, %s22
        %v330 = vld [vmem:[%s2] sm:$0xf]
        %v331 = vld [vmem:[%s2 + $0x4] sm:$0xf]
        %v332 = vld [vmem:[%s3] sm:$0xf]
        %v333 = vld [vmem:[%s3 + $0x4] sm:$0xf]
        %v334 = vunpack.c.l.bf16 %v332
        %v335 = vunpack.c.l.bf16 %v333
        %v336 = vld [vmem:[%s7] sm:$0x1]
        %v337 = vld [vmem:[%s320] sm:$0xf]
        %v338 = vld [vmem:[%s320 + $0x4] sm:$0xf]
        %v339 = vld [vmem:[%s320 + $0x8] sm:$0xf]
        %v340 = vld [vmem:[%s320 + $0xc] sm:$0xf]
        %v341 = vld [vmem:[%s4] sm:$0x3]
        %v342 = vld [vmem:[%s326] sm:$0xf]
        %v343 = vld [vmem:[%s326 + $0x4] sm:$0xf]
        %v344 = vld [vmem:[%s326 + $0x8] sm:$0xf]
        %v345 = vld [vmem:[%s326 + $0xc] sm:$0xf]
        %v346 = vld [vmem:[%s5] sm:$0xf]
        %v347 = vld [vmem:[%s5 + $0x4] sm:$0xf]
        %v348 = vld [vmem:[%s5 + $0x8] sm:$0xf]
        %v349 = vld [vmem:[%s5 + $0xc] sm:$0xf]
        %v354 = vunpack.c.l.b16 %v342
        %v355 = vunpack.c.l.b16 %v343
        %v356 = vunpack.c.l.b16 %v344
        %v357 = vunpack.c.l.b16 %v345
        %v358 = vpack.c.b16 %v355, %v354
        %v359 = vpack.c.b16 %v357, %v356
        %v364 = vunpack.c.l.b16 %v346
        %v365 = vunpack.c.l.b16 %v347
        %v366 = vunpack.c.l.b16 %v348
        %v367 = vunpack.c.l.b16 %v349
        %v368 = vpack.c.b16 %v365, %v364
        %v369 = vpack.c.b16 %v367, %v366
        %vm372 = vcmask 261120
        %v374 = vsel %vm372, %v358, 0
        %v377 = vsel %vm372, %v359, 0
        %379 = vmatpush.bf16.msra.mxu0 0
        %380 = vmatpush.bf16.msra.mxu0 0
        %381 = vmatpush.bf16.msra.mxu0 0
        %382 = vmatpush.bf16.msra.mxu0 0
        %383 = vmatpush.bf16.msra.mxu0 0
        %384 = vmatpush.bf16.msra.mxu0 0
        %385 = vmatpush.bf16.msra.mxu0 %v369
        %386 = vmatpush.bf16.msra.mxu0 %v368
        %387 = vmatmul.bf16.gmra.mxu0 %v374
        %v388 = vpop.f32.mrf.mxu0
        %v389 = vadd.f32 0.0, %v388
        %v390 = vpop.f32.mrf.mxu0
        %v391 = vadd.f32 0.0, %v390
        %392 = vmatmul.bf16.gmra.mxu0 %v377
        %v393 = vpop.f32.mrf.mxu0
        %v394 = vadd.f32 0.0, %v393
        %v395 = vpop.f32.mrf.mxu0
        %v396 = vadd.f32 0.0, %v395
        %397 = vdwg.mxu0
        %v402 = vunpack.c.l.b16 %v337
        %v403 = vunpack.c.l.b16 %v338
        %v404 = vunpack.c.l.b16 %v339
        %v405 = vunpack.c.l.b16 %v340
        %v406 = vpack.c.b16 %v403, %v402
        %v407 = vpack.c.b16 %v405, %v404
        %vm408 = vcmask 31744
        %v410 = vsel %vm408, %v406, 0
        %v413 = vsel %vm408, %v407, 0
        %vm415 = vcmask 1041408
        %v417 = vsel %vm415, %v341, 0
        %419 = vmatpush.bf16.msra.mxu0 0
        %420 = vmatpush.bf16.msra.mxu0 0
        %421 = vmatpush.bf16.msra.mxu0 0
        %422 = vmatpush.bf16.msra.mxu0 0
        %423 = vmatpush.bf16.msra.mxu0 0
        %424 = vmatpush.bf16.msra.mxu0 0
        %425 = vmatpush.bf16.msra.mxu0 0
        %426 = vmatpush.bf16.msra.mxu0 %v417
        %427 = vmatmul.bf16.gmra.mxu0 %v410
        %v428 = vpop.f32.mrf.mxu0
        %v429 = vadd.f32 %v389, %v428
        %v430 = vpop.f32.mrf.mxu0
        %v431 = vadd.f32 %v391, %v430
        %432 = vmatmul.bf16.gmra.mxu0 %v413
        %v433 = vpop.f32.mrf.mxu0
        %v434 = vadd.f32 %v394, %v433
        %v435 = vpop.f32.mrf.mxu0
        %v436 = vadd.f32 %v396, %v435
        %437 = vdwg.mxu0
        %v438 = vpack.c.bf16 %v429, %v429
        %v439 = vpack.c.bf16 %v431, %v431
        %v440 = vpack.c.bf16 %v434, %v434
        %v441 = vpack.c.bf16 %v436, %v436
        %v442 = vld [vmem:[%s6] sm:$0xf]
        %v443 = vld [vmem:[%s6 + $0x4] sm:$0xf]
        %v444 = vld [vmem:[%s6 + $0x8] sm:$0xf]
        %v445 = vld [vmem:[%s6 + $0xc] sm:$0xf]
        %v450 = vunpack.c.l.b16 %v438
        %v451 = vunpack.c.l.b16 %v439
        %v452 = vunpack.c.l.b16 %v440
        %v453 = vunpack.c.l.b16 %v441
        %v454 = vpack.c.b16 %v451, %v450
        %v455 = vpack.c.b16 %v453, %v452
        %v460 = vunpack.c.l.b16 %v442
        %v461 = vunpack.c.l.b16 %v443
        %v462 = vunpack.c.l.b16 %v444
        %v463 = vunpack.c.l.b16 %v445
        %v464 = vpack.c.b16 %v461, %v460
        %v465 = vpack.c.b16 %v463, %v462
        %v469 = vsel %vm372, %v454, 0
        %v472 = vsel %vm372, %v455, 0
        %474 = vmatpush.bf16.msra.mxu0 0
        %475 = vmatpush.bf16.msra.mxu0 0
        %476 = vmatpush.bf16.msra.mxu0 0
        %477 = vmatpush.bf16.msra.mxu0 0
        %478 = vmatpush.bf16.msra.mxu0 0
        %479 = vmatpush.bf16.msra.mxu0 0
        %480 = vmatpush.bf16.msra.mxu0 %v465
        %481 = vmatpush.bf16.msra.mxu0 %v464
        %482 = vmatmul.bf16.gmra.mxu0 %v469
        %v483 = vpop.f32.mrf.mxu0
        %v484 = vadd.f32 0.0, %v483
        %v485 = vpop.f32.mrf.mxu0
        %v486 = vadd.f32 0.0, %v485
        %487 = vmatmul.bf16.gmra.mxu0 %v472
        %v488 = vpop.f32.mrf.mxu0
        %v489 = vadd.f32 0.0, %v488
        %v490 = vpop.f32.mrf.mxu0
        %v491 = vadd.f32 0.0, %v490
        %492 = vdwg.mxu0
        %493 = vxpose.xlu0.b32.start [1/16] %v484, 128
        %494 = vxpose.xlu0.b32.cont [2/16] %v486, 128
        %495 = vxpose.xlu0.b32.cont [3/16] 0.0, 128
        %496 = vxpose.xlu0.b32.cont [4/16] 0.0, 128
        %497 = vxpose.xlu0.b32.cont [5/16] 0.0, 128
        %498 = vxpose.xlu0.b32.cont [6/16] 0.0, 128
        %499 = vxpose.xlu0.b32.cont [7/16] 0.0, 128
        %500 = vxpose.xlu0.b32.cont [8/16] 0.0, 128
        %501 = vxpose.xlu0.b32.cont [9/16] 0.0, 128
        %502 = vxpose.xlu0.b32.cont [10/16] 0.0, 128
        %503 = vxpose.xlu0.b32.cont [11/16] 0.0, 128
        %504 = vxpose.xlu0.b32.cont [12/16] 0.0, 128
        %505 = vxpose.xlu0.b32.cont [13/16] 0.0, 128
        %506 = vxpose.xlu0.b32.cont [14/16] 0.0, 128
        %507 = vxpose.xlu0.b32.cont [15/16] 0.0, 128
        %508 = vxpose.xlu0.b32.end [16/16] 0.0, 128
        %v509 = vpop.trf.xlu0
        %v510 = vpop.trf.xlu0
        %v511 = vpop.trf.xlu0
        %v512 = vpop.trf.xlu0
        %v513 = vpop.trf.xlu0
        %v514 = vpop.trf.xlu0
        %v515 = vpop.trf.xlu0
        %v516 = vpop.trf.xlu0
        %v517 = vpop.trf.xlu0
        %v518 = vpop.trf.xlu0
        %v519 = vpop.trf.xlu0
        %v520 = vpop.trf.xlu0
        %v521 = vpop.trf.xlu0
        %v522 = vpop.trf.xlu0
        %v523 = vpop.trf.xlu0
        %v524 = vpop.trf.xlu0
        %527 = vrot.lane.b32.xlu0 %v484, 120
        %v528 = vpop.permute.xlu0 %527
        %529 = vrot.lane.b32.xlu0 %v486, 120
        %v530 = vpop.permute.xlu0 %529
        %533 = vxpose.xlu0.b32.start [1/16] %v528, 128
        %534 = vxpose.xlu0.b32.cont [2/16] %v530, 128
        %535 = vxpose.xlu0.b32.cont [3/16] 0.0, 128
        %536 = vxpose.xlu0.b32.cont [4/16] 0.0, 128
        %537 = vxpose.xlu0.b32.cont [5/16] 0.0, 128
        %538 = vxpose.xlu0.b32.cont [6/16] 0.0, 128
        %539 = vxpose.xlu0.b32.cont [7/16] 0.0, 128
        %540 = vxpose.xlu0.b32.cont [8/16] 0.0, 128
        %541 = vxpose.xlu0.b32.cont [9/16] 0.0, 128
        %542 = vxpose.xlu0.b32.cont [10/16] 0.0, 128
        %543 = vxpose.xlu0.b32.cont [11/16] 0.0, 128
        %544 = vxpose.xlu0.b32.cont [12/16] 0.0, 128
        %545 = vxpose.xlu0.b32.cont [13/16] 0.0, 128
        %546 = vxpose.xlu0.b32.cont [14/16] 0.0, 128
        %547 = vxpose.xlu0.b32.cont [15/16] 0.0, 128
        %548 = vxpose.xlu0.b32.end [16/16] 0.0, 128
        %v549 = vpop.trf.xlu0
        %v550 = vpop.trf.xlu0
        %v551 = vpop.trf.xlu0
        %v552 = vpop.trf.xlu0
        %v553 = vpop.trf.xlu0
        %v554 = vpop.trf.xlu0
        %v555 = vpop.trf.xlu0
        %v556 = vpop.trf.xlu0
        %v557 = vpop.trf.xlu0
        %v558 = vpop.trf.xlu0
        %v559 = vpop.trf.xlu0
        %v560 = vpop.trf.xlu0
        %v561 = vpop.trf.xlu0
        %v562 = vpop.trf.xlu0
        %v563 = vpop.trf.xlu0
        %v564 = vpop.trf.xlu0
        %v565 = vperm.slane %v509, 0
        %v566 = vlaneseq
        %v567 = vshrl.u32 %v566, 7
        %569 = vset.pattern.permute.xlu0 %v567
        %570 = vperm.xlu0 %569, %v565
        %v571 = vpop.permute.xlu0 %570
        %v572 = vlaneseq
        %v573 = vshrl.u32 %v572, 7
        %v574 = vadd.s32 %v573, 8
        %575 = vset.pattern.permute.xlu0 %v574
        %576 = vperm.xlu0 %575, %v565
        %v577 = vpop.permute.xlu0 %576
        %v578 = vperm.slane %v509, 1
        %v579 = vlaneseq
        %v580 = vshrl.u32 %v579, 7
        %582 = vset.pattern.permute.xlu0 %v580
        %583 = vperm.xlu0 %582, %v578
        %v584 = vpop.permute.xlu0 %583
        %v585 = vlaneseq
        %v586 = vshrl.u32 %v585, 7
        %v587 = vadd.s32 %v586, 8
        %588 = vset.pattern.permute.xlu0 %v587
        %589 = vperm.xlu0 %588, %v578
        %v590 = vpop.permute.xlu0 %589
        %v591 = vperm.slane %v509, 2
        %v592 = vlaneseq
        %v593 = vshrl.u32 %v592, 7
        %595 = vset.pattern.permute.xlu0 %v593
        %596 = vperm.xlu0 %595, %v591
        %v597 = vpop.permute.xlu0 %596
        %v598 = vlaneseq
        %v599 = vshrl.u32 %v598, 7
        %v600 = vadd.s32 %v599, 8
        %601 = vset.pattern.permute.xlu0 %v600
        %602 = vperm.xlu0 %601, %v591
        %v603 = vpop.permute.xlu0 %602
        %v604 = vperm.slane %v509, 3
        %v605 = vlaneseq
        %v606 = vshrl.u32 %v605, 7
        %608 = vset.pattern.permute.xlu0 %v606
        %609 = vperm.xlu0 %608, %v604
        %v610 = vpop.permute.xlu0 %609
        %v611 = vlaneseq
        %v612 = vshrl.u32 %v611, 7
        %v613 = vadd.s32 %v612, 8
        %614 = vset.pattern.permute.xlu0 %v613
        %615 = vperm.xlu0 %614, %v604
        %v616 = vpop.permute.xlu0 %615
        %v617 = vperm.slane %v509, 4
        %v618 = vlaneseq
        %v619 = vshrl.u32 %v618, 7
        %621 = vset.pattern.permute.xlu0 %v619
        %622 = vperm.xlu0 %621, %v617
        %v623 = vpop.permute.xlu0 %622
        %v624 = vlaneseq
        %v625 = vshrl.u32 %v624, 7
        %v626 = vadd.s32 %v625, 8
        %627 = vset.pattern.permute.xlu0 %v626
        %628 = vperm.xlu0 %627, %v617
        %v629 = vpop.permute.xlu0 %628
        %v630 = vperm.slane %v509, 5
        %v631 = vlaneseq
        %v632 = vshrl.u32 %v631, 7
        %634 = vset.pattern.permute.xlu0 %v632
        %635 = vperm.xlu0 %634, %v630
        %v636 = vpop.permute.xlu0 %635
        %v637 = vlaneseq
        %v638 = vshrl.u32 %v637, 7
        %v639 = vadd.s32 %v638, 8
        %640 = vset.pattern.permute.xlu0 %v639
        %641 = vperm.xlu0 %640, %v630
        %v642 = vpop.permute.xlu0 %641
        %v643 = vperm.slane %v509, 6
        %v644 = vlaneseq
        %v645 = vshrl.u32 %v644, 7
        %647 = vset.pattern.permute.xlu0 %v645
        %648 = vperm.xlu0 %647, %v643
        %v649 = vpop.permute.xlu0 %648
        %v650 = vlaneseq
        %v651 = vshrl.u32 %v650, 7
        %v652 = vadd.s32 %v651, 8
        %653 = vset.pattern.permute.xlu0 %v652
        %654 = vperm.xlu0 %653, %v643
        %v655 = vpop.permute.xlu0 %654
        %v656 = vperm.slane %v509, 7
        %v657 = vlaneseq
        %v658 = vshrl.u32 %v657, 7
        %660 = vset.pattern.permute.xlu0 %v658
        %661 = vperm.xlu0 %660, %v656
        %v662 = vpop.permute.xlu0 %661
        %v663 = vlaneseq
        %v664 = vshrl.u32 %v663, 7
        %v665 = vadd.s32 %v664, 8
        %666 = vset.pattern.permute.xlu0 %v665
        %667 = vperm.xlu0 %666, %v656
        %v668 = vpop.permute.xlu0 %667
        %v670 = vrot.slane %v549, 1
        %v671 = vrot.slane %v549, 2
        %v672 = vrot.slane %v549, 3
        %v673 = vrot.slane %v549, 4
        %v674 = vrot.slane %v549, 5
        %v675 = vrot.slane %v549, 6
        %v676 = vrot.slane %v549, 7
        %v677 = vperm.slane %v549, 0
        %v678 = vperm.slane %v670, 0
        %v679 = vperm.slane %v671, 0
        %v680 = vperm.slane %v672, 0
        %v681 = vperm.slane %v673, 0
        %v682 = vperm.slane %v674, 0
        %v683 = vperm.slane %v675, 0
        %v684 = vperm.slane %v676, 0
        %v693 = vadd.f32 %v571, %v677
        %v694 = vadd.f32 %v577, %v677
        %v695 = vadd.f32 %v584, %v678
        %v696 = vadd.f32 %v590, %v678
        %v697 = vadd.f32 %v597, %v679
        %v698 = vadd.f32 %v603, %v679
        %v699 = vadd.f32 %v610, %v680
        %v700 = vadd.f32 %v616, %v680
        %v701 = vadd.f32 %v623, %v681
        %v702 = vadd.f32 %v629, %v681
        %v703 = vadd.f32 %v636, %v682
        %v704 = vadd.f32 %v642, %v682
        %v705 = vadd.f32 %v649, %v683
        %v706 = vadd.f32 %v655, %v683
        %v707 = vadd.f32 %v662, %v684
        %v708 = vadd.f32 %v668, %v684
        %v709 = vmul.f32 %v693, 0.2
        %v710 = vmul.f32 %v694, 0.2
        %v711 = vmul.f32 %v695, 0.2
        %v712 = vmul.f32 %v696, 0.2
        %v713 = vmul.f32 %v697, 0.2
        %v714 = vmul.f32 %v698, 0.2
        %v715 = vmul.f32 %v699, 0.2
        %v716 = vmul.f32 %v700, 0.2
        %v717 = vmul.f32 %v701, 0.2
        %v718 = vmul.f32 %v702, 0.2
        %v719 = vmul.f32 %v703, 0.2
        %v720 = vmul.f32 %v704, 0.2
        %v721 = vmul.f32 %v705, 0.2
        %v722 = vmul.f32 %v706, 0.2
        %v723 = vmul.f32 %v707, 0.2
        %v724 = vmul.f32 %v708, 0.2
        %v725 = vmax.f32 %v693, %v709
        %v726 = vmax.f32 %v694, %v710
        %v727 = vmax.f32 %v695, %v711
        %v728 = vmax.f32 %v696, %v712
        %v729 = vmax.f32 %v697, %v713
        %v730 = vmax.f32 %v698, %v714
        %v731 = vmax.f32 %v699, %v715
        %v732 = vmax.f32 %v700, %v716
        %v733 = vmax.f32 %v701, %v717
        %v734 = vmax.f32 %v702, %v718
        %v735 = vmax.f32 %v703, %v719
        %v736 = vmax.f32 %v704, %v720
        %v737 = vmax.f32 %v705, %v721
        %v738 = vmax.f32 %v706, %v722
        %v739 = vmax.f32 %v707, %v723
        %v740 = vmax.f32 %v708, %v724
        %v741 = vadd.f32 %v725, %v334
        %v742 = vadd.f32 %v726, %v335
        %v743 = vadd.f32 %v727, %v334
        %v744 = vadd.f32 %v728, %v335
        %v745 = vadd.f32 %v729, %v334
        %v746 = vadd.f32 %v730, %v335
        %v747 = vadd.f32 %v731, %v334
        %v748 = vadd.f32 %v732, %v335
        %v749 = vadd.f32 %v733, %v334
        %v750 = vadd.f32 %v734, %v335
        %v751 = vadd.f32 %v735, %v334
        %v752 = vadd.f32 %v736, %v335
        %v753 = vadd.f32 %v737, %v334
        %v754 = vadd.f32 %v738, %v335
        %v755 = vadd.f32 %v739, %v334
        %v756 = vadd.f32 %v740, %v335
        %vm757 = vcmask 130048
        %v758 = vsel %vm757, %v741, -inf
        %759 = vmax.xlane.f32.xlu0 %v758
        %v760 = vpop.xlane.xlu0 %759
        %v761 = vsel %vm757, %v742, -inf
        %762 = vmax.xlane.f32.xlu0 %v761
        %v763 = vpop.xlane.xlu0 %762
        %v764 = vsel %vm757, %v743, -inf
        %765 = vmax.xlane.f32.xlu0 %v764
        %v766 = vpop.xlane.xlu0 %765
        %v767 = vsel %vm757, %v744, -inf
        %768 = vmax.xlane.f32.xlu0 %v767
        %v769 = vpop.xlane.xlu0 %768
        %v770 = vsel %vm757, %v745, -inf
        %771 = vmax.xlane.f32.xlu0 %v770
        %v772 = vpop.xlane.xlu0 %771
        %v773 = vsel %vm757, %v746, -inf
        %774 = vmax.xlane.f32.xlu0 %v773
        %v775 = vpop.xlane.xlu0 %774
        %v776 = vsel %vm757, %v747, -inf
        %777 = vmax.xlane.f32.xlu0 %v776
        %v778 = vpop.xlane.xlu0 %777
        %v779 = vsel %vm757, %v748, -inf
        %780 = vmax.xlane.f32.xlu0 %v779
        %v781 = vpop.xlane.xlu0 %780
        %v782 = vsel %vm757, %v749, -inf
        %783 = vmax.xlane.f32.xlu0 %v782
        %v784 = vpop.xlane.xlu0 %783
        %v785 = vsel %vm757, %v750, -inf
        %786 = vmax.xlane.f32.xlu0 %v785
        %v787 = vpop.xlane.xlu0 %786
        %v788 = vsel %vm757, %v751, -inf
        %789 = vmax.xlane.f32.xlu0 %v788
        %v790 = vpop.xlane.xlu0 %789
        %v791 = vsel %vm757, %v752, -inf
        %792 = vmax.xlane.f32.xlu0 %v791
        %v793 = vpop.xlane.xlu0 %792
        %v794 = vsel %vm757, %v753, -inf
        %795 = vmax.xlane.f32.xlu0 %v794
        %v796 = vpop.xlane.xlu0 %795
        %v797 = vsel %vm757, %v754, -inf
        %798 = vmax.xlane.f32.xlu0 %v797
        %v799 = vpop.xlane.xlu0 %798
        %v800 = vsel %vm757, %v755, -inf
        %801 = vmax.xlane.f32.xlu0 %v800
        %v802 = vpop.xlane.xlu0 %801
        %v803 = vsel %vm757, %v756, -inf
        %804 = vmax.xlane.f32.xlu0 %v803
        %v805 = vpop.xlane.xlu0 %804
        %v806 = vsub.f32 %v741, %v760
        %v807 = vsub.f32 %v742, %v763
        %v808 = vsub.f32 %v743, %v766
        %v809 = vsub.f32 %v744, %v769
        %v810 = vsub.f32 %v745, %v772
        %v811 = vsub.f32 %v746, %v775
        %v812 = vsub.f32 %v747, %v778
        %v813 = vsub.f32 %v748, %v781
        %v814 = vsub.f32 %v749, %v784
        %v815 = vsub.f32 %v750, %v787
        %v816 = vsub.f32 %v751, %v790
        %v817 = vsub.f32 %v752, %v793
        %v818 = vsub.f32 %v753, %v796
        %v819 = vsub.f32 %v754, %v799
        %v820 = vsub.f32 %v755, %v802
        %v821 = vsub.f32 %v756, %v805
        %v822 = vmul.f32 %v806, 1.442695
        %v823 = vpow.pop %v822
        %v824 = vmul.f32 %v807, 1.442695
        %v825 = vpow.pop %v824
        %v826 = vmul.f32 %v808, 1.442695
        %v827 = vpow.pop %v826
        %v828 = vmul.f32 %v809, 1.442695
        %v829 = vpow.pop %v828
        %v830 = vmul.f32 %v810, 1.442695
        %v831 = vpow.pop %v830
        %v832 = vmul.f32 %v811, 1.442695
        %v833 = vpow.pop %v832
        %v834 = vmul.f32 %v812, 1.442695
        %v835 = vpow.pop %v834
        %v836 = vmul.f32 %v813, 1.442695
        %v837 = vpow.pop %v836
        %v838 = vmul.f32 %v814, 1.442695
        %v839 = vpow.pop %v838
        %v840 = vmul.f32 %v815, 1.442695
        %v841 = vpow.pop %v840
        %v842 = vmul.f32 %v816, 1.442695
        %v843 = vpow.pop %v842
        %v844 = vmul.f32 %v817, 1.442695
        %v845 = vpow.pop %v844
        %v846 = vmul.f32 %v818, 1.442695
        %v847 = vpow.pop %v846
        %v848 = vmul.f32 %v819, 1.442695
        %v849 = vpow.pop %v848
        %v850 = vmul.f32 %v820, 1.442695
        %v851 = vpow.pop %v850
        %v852 = vmul.f32 %v821, 1.442695
        %v853 = vpow.pop %v852
        %v854 = vsel %vm757, %v823, 0.0
        %855 = vadd.xlane.f32.xlu0 %v854
        %v856 = vpop.xlane.xlu0 %855
        %v857 = vsel %vm757, %v825, 0.0
        %858 = vadd.xlane.f32.xlu0 %v857
        %v859 = vpop.xlane.xlu0 %858
        %v860 = vsel %vm757, %v827, 0.0
        %861 = vadd.xlane.f32.xlu0 %v860
        %v862 = vpop.xlane.xlu0 %861
        %v863 = vsel %vm757, %v829, 0.0
        %864 = vadd.xlane.f32.xlu0 %v863
        %v865 = vpop.xlane.xlu0 %864
        %v866 = vsel %vm757, %v831, 0.0
        %867 = vadd.xlane.f32.xlu0 %v866
        %v868 = vpop.xlane.xlu0 %867
        %v869 = vsel %vm757, %v833, 0.0
        %870 = vadd.xlane.f32.xlu0 %v869
        %v871 = vpop.xlane.xlu0 %870
        %v872 = vsel %vm757, %v835, 0.0
        %873 = vadd.xlane.f32.xlu0 %v872
        %v874 = vpop.xlane.xlu0 %873
        %v875 = vsel %vm757, %v837, 0.0
        %876 = vadd.xlane.f32.xlu0 %v875
        %v877 = vpop.xlane.xlu0 %876
        %v878 = vsel %vm757, %v839, 0.0
        %879 = vadd.xlane.f32.xlu0 %v878
        %v880 = vpop.xlane.xlu0 %879
        %v881 = vsel %vm757, %v841, 0.0
        %882 = vadd.xlane.f32.xlu0 %v881
        %v883 = vpop.xlane.xlu0 %882
        %v884 = vsel %vm757, %v843, 0.0
        %885 = vadd.xlane.f32.xlu0 %v884
        %v886 = vpop.xlane.xlu0 %885
        %v887 = vsel %vm757, %v845, 0.0
        %888 = vadd.xlane.f32.xlu0 %v887
        %v889 = vpop.xlane.xlu0 %888
        %v890 = vsel %vm757, %v847, 0.0
        %891 = vadd.xlane.f32.xlu0 %v890
        %v892 = vpop.xlane.xlu0 %891
        %v893 = vsel %vm757, %v849, 0.0
        %894 = vadd.xlane.f32.xlu0 %v893
        %v895 = vpop.xlane.xlu0 %894
        %v896 = vsel %vm757, %v851, 0.0
        %897 = vadd.xlane.f32.xlu0 %v896
        %v898 = vpop.xlane.xlu0 %897
        %v899 = vsel %vm757, %v853, 0.0
        %900 = vadd.xlane.f32.xlu0 %v899
        %v901 = vpop.xlane.xlu0 %900
        %v902 = vrcp.pop %v856
        %v903 = vrcp.pop %v859
        %v904 = vrcp.pop %v862
        %v905 = vrcp.pop %v865
        %v906 = vrcp.pop %v868
        %v907 = vrcp.pop %v871
        %v908 = vrcp.pop %v874
        %v909 = vrcp.pop %v877
        %v910 = vrcp.pop %v880
        %v911 = vrcp.pop %v883
        %v912 = vrcp.pop %v886
        %v913 = vrcp.pop %v889
        %v914 = vrcp.pop %v892
        %v915 = vrcp.pop %v895
        %v916 = vrcp.pop %v898
        %v917 = vrcp.pop %v901
        %v918 = vmul.f32 %v823, %v902
        %v919 = vmul.f32 %v825, %v903
        %v920 = vmul.f32 %v827, %v904
        %v921 = vmul.f32 %v829, %v905
        %v922 = vmul.f32 %v831, %v906
        %v923 = vmul.f32 %v833, %v907
        %v924 = vmul.f32 %v835, %v908
        %v925 = vmul.f32 %v837, %v909
        %v926 = vmul.f32 %v839, %v910
        %v927 = vmul.f32 %v841, %v911
        %v928 = vmul.f32 %v843, %v912
        %v929 = vmul.f32 %v845, %v913
        %v930 = vmul.f32 %v847, %v914
        %v931 = vmul.f32 %v849, %v915
        %v932 = vmul.f32 %v851, %v916
        %v933 = vmul.f32 %v853, %v917
        %v934 = vpack.c.bf16 %v918, %v918
        %v935 = vpack.c.bf16 %v919, %v919
        %v936 = vpack.c.bf16 %v920, %v920
        %v937 = vpack.c.bf16 %v921, %v921
        %v938 = vpack.c.bf16 %v922, %v922
        %v939 = vpack.c.bf16 %v923, %v923
        %v940 = vpack.c.bf16 %v924, %v924
        %v941 = vpack.c.bf16 %v925, %v925
        %v942 = vpack.c.bf16 %v926, %v926
        %v943 = vpack.c.bf16 %v927, %v927
        %v944 = vpack.c.bf16 %v928, %v928
        %v945 = vpack.c.bf16 %v929, %v929
        %v946 = vpack.c.bf16 %v930, %v930
        %v947 = vpack.c.bf16 %v931, %v931
        %v948 = vpack.c.bf16 %v932, %v932
        %v949 = vpack.c.bf16 %v933, %v933
        %v952 = vunpack.c.l.b16 %v934
        %v953 = vunpack.c.l.b16 %v935
        %v954 = vpack.c.b16 %v953, %v952
        %v957 = vsel %vm757, %v954, 0
        %959 = vmatpush.bf16.msra.mxu0 0
        %960 = vmatpush.bf16.msra.mxu0 0
        %961 = vmatpush.bf16.msra.mxu0 0
        %962 = vmatpush.bf16.msra.mxu0 0
        %963 = vmatpush.bf16.msra.mxu0 0
        %964 = vmatpush.bf16.msra.mxu0 0
        %965 = vmatpush.bf16.msra.mxu0 0
        %966 = vmatpush.bf16.msra.mxu0 %v454
        %967 = vmatmul.bf16.gmra.mxu0 %v957
        %v968 = vpop.f32.mrf.mxu0
        %v969 = vadd.f32 0.0, %v968
        %v970 = vpop.f32.mrf.mxu0
        %v971 = vadd.f32 0.0, %v970
        %972 = vdwg.mxu0
        %973 = vst.msk [vmem:[#allocation2] sm:$0xff] %vm408, %v969
        %974 = vst.msk [vmem:[#allocation2 + $0x8] sm:$0xff] %vm408, %v971
        %v977 = vunpack.c.l.b16 %v936
        %v978 = vunpack.c.l.b16 %v937
        %v979 = vpack.c.b16 %v978, %v977
        %980 = vrot.lane.b32.xlu0 %v454, 124
        %v981 = vpop.permute.xlu0 %980
        %v984 = vsel %vm757, %v979, 0
        %986 = vmatpush.bf16.msra.mxu0 0
        %987 = vmatpush.bf16.msra.mxu0 0
        %988 = vmatpush.bf16.msra.mxu0 0
        %989 = vmatpush.bf16.msra.mxu0 0
        %990 = vmatpush.bf16.msra.mxu0 0
        %991 = vmatpush.bf16.msra.mxu0 0
        %992 = vmatpush.bf16.msra.mxu0 0
        %993 = vmatpush.bf16.msra.mxu0 %v981
        %994 = vmatmul.bf16.gmra.mxu0 %v984
        %v995 = vpop.f32.mrf.mxu0
        %v996 = vadd.f32 0.0, %v995
        %v997 = vpop.f32.mrf.mxu0
        %v998 = vadd.f32 0.0, %v997
        %999 = vdwg.mxu0
        %1002 = vrot.lane.b32.xlu0 %v996, 4
        %v1003 = vpop.permute.xlu0 %1002
        %1004 = vrot.lane.b32.xlu0 %v998, 4
        %v1005 = vpop.permute.xlu0 %1004
        %vm1008 = vcmask 64544
        %1009 = vst.msk [vmem:[#allocation2] sm:$0xff] %vm1008, %v1003
        %1010 = vst.msk [vmem:[#allocation2 + $0x8] sm:$0xff] %vm1008, %v1005
        %v1013 = vunpack.c.l.b16 %v938
        %v1014 = vunpack.c.l.b16 %v939
        %v1015 = vpack.c.b16 %v1014, %v1013
        %1016 = vrot.lane.b32.xlu0 %v454, 120
        %v1017 = vpop.permute.xlu0 %1016
        %v1020 = vsel %vm757, %v1015, 0
        %1022 = vmatpush.bf16.msra.mxu0 0
        %1023 = vmatpush.bf16.msra.mxu0 0
        %1024 = vmatpush.bf16.msra.mxu0 0
        %1025 = vmatpush.bf16.msra.mxu0 0
        %1026 = vmatpush.bf16.msra.mxu0 0
        %1027 = vmatpush.bf16.msra.mxu0 0
        %1028 = vmatpush.bf16.msra.mxu0 0
        %1029 = vmatpush.bf16.msra.mxu0 %v1017
        %1030 = vmatmul.bf16.gmra.mxu0 %v1020
        %v1031 = vpop.f32.mrf.mxu0
        %v1032 = vadd.f32 0.0, %v1031
        %v1033 = vpop.f32.mrf.mxu0
        %v1034 = vadd.f32 0.0, %v1033
        %1035 = vdwg.mxu0
        %1038 = vrot.lane.b32.xlu0 %v1032, 8
        %v1039 = vpop.permute.xlu0 %1038
        %1040 = vrot.lane.b32.xlu0 %v1034, 8
        %v1041 = vpop.permute.xlu0 %1040
        %vm1044 = vcmask 97344
        %1045 = vst.msk [vmem:[#allocation2] sm:$0xff] %vm1044, %v1039
        %1046 = vst.msk [vmem:[#allocation2 + $0x8] sm:$0xff] %vm1044, %v1041
        %v1049 = vunpack.c.l.b16 %v940
        %v1050 = vunpack.c.l.b16 %v941
        %v1051 = vpack.c.b16 %v1050, %v1049
        %1052 = vrot.lane.b32.xlu0 %v454, 116
        %v1053 = vpop.permute.xlu0 %1052
        %v1056 = vsel %vm757, %v1051, 0
        %1058 = vmatpush.bf16.msra.mxu0 0
        %1059 = vmatpush.bf16.msra.mxu0 0
        %1060 = vmatpush.bf16.msra.mxu0 0
        %1061 = vmatpush.bf16.msra.mxu0 0
        %1062 = vmatpush.bf16.msra.mxu0 0
        %1063 = vmatpush.bf16.msra.mxu0 0
        %1064 = vmatpush.bf16.msra.mxu0 0
        %1065 = vmatpush.bf16.msra.mxu0 %v1053
        %1066 = vmatmul.bf16.gmra.mxu0 %v1056
        %v1067 = vpop.f32.mrf.mxu0
        %v1068 = vadd.f32 0.0, %v1067
        %v1069 = vpop.f32.mrf.mxu0
        %v1070 = vadd.f32 0.0, %v1069
        %1071 = vdwg.mxu0
        %1074 = vrot.lane.b32.xlu0 %v1068, 12
        %v1075 = vpop.permute.xlu0 %1074
        %1076 = vrot.lane.b32.xlu0 %v1070, 12
        %v1077 = vpop.permute.xlu0 %1076
        %vm1080 = vcmask 130144
        %1081 = vst.msk [vmem:[#allocation2] sm:$0xff] %vm1080, %v1075
        %1082 = vst.msk [vmem:[#allocation2 + $0x8] sm:$0xff] %vm1080, %v1077
        %v1085 = vunpack.c.l.b16 %v942
        %v1086 = vunpack.c.l.b16 %v943
        %v1087 = vpack.c.b16 %v1086, %v1085
        %1088 = vrot.lane.b32.xlu0 %v454, 112
        %v1089 = vpop.permute.xlu0 %1088
        %v1092 = vsel %vm757, %v1087, 0
        %1094 = vmatpush.bf16.msra.mxu0 0
        %1095 = vmatpush.bf16.msra.mxu0 0
        %1096 = vmatpush.bf16.msra.mxu0 0
        %1097 = vmatpush.bf16.msra.mxu0 0
        %1098 = vmatpush.bf16.msra.mxu0 0
        %1099 = vmatpush.bf16.msra.mxu0 0
        %1100 = vmatpush.bf16.msra.mxu0 0
        %1101 = vmatpush.bf16.msra.mxu0 %v1089
        %1102 = vmatmul.bf16.gmra.mxu0 %v1092
        %v1103 = vpop.f32.mrf.mxu0
        %v1104 = vadd.f32 0.0, %v1103
        %v1105 = vpop.f32.mrf.mxu0
        %v1106 = vadd.f32 0.0, %v1105
        %1107 = vdwg.mxu0
        %1110 = vrot.lane.b32.xlu0 %v1104, 16
        %v1111 = vpop.permute.xlu0 %1110
        %1112 = vrot.lane.b32.xlu0 %v1106, 16
        %v1113 = vpop.permute.xlu0 %1112
        %vm1116 = vcmask 162944
        %1117 = vst.msk [vmem:[#allocation2] sm:$0xff] %vm1116, %v1111
        %1118 = vst.msk [vmem:[#allocation2 + $0x8] sm:$0xff] %vm1116, %v1113
        %v1121 = vunpack.c.l.b16 %v944
        %v1122 = vunpack.c.l.b16 %v945
        %v1123 = vpack.c.b16 %v1122, %v1121
        %1124 = vrot.lane.b32.xlu0 %v454, 108
        %v1125 = vpop.permute.xlu0 %1124
        %v1128 = vsel %vm757, %v1123, 0
        %1130 = vmatpush.bf16.msra.mxu0 0
        %1131 = vmatpush.bf16.msra.mxu0 0
        %1132 = vmatpush.bf16.msra.mxu0 0
        %1133 = vmatpush.bf16.msra.mxu0 0
        %1134 = vmatpush.bf16.msra.mxu0 0
        %1135 = vmatpush.bf16.msra.mxu0 0
        %1136 = vmatpush.bf16.msra.mxu0 0
        %1137 = vmatpush.bf16.msra.mxu0 %v1125
        %1138 = vmatmul.bf16.gmra.mxu0 %v1128
        %v1139 = vpop.f32.mrf.mxu0
        %v1140 = vadd.f32 0.0, %v1139
        %v1141 = vpop.f32.mrf.mxu0
        %v1142 = vadd.f32 0.0, %v1141
        %1143 = vdwg.mxu0
        %1146 = vrot.lane.b32.xlu0 %v1140, 20
        %v1147 = vpop.permute.xlu0 %1146
        %1148 = vrot.lane.b32.xlu0 %v1142, 20
        %v1149 = vpop.permute.xlu0 %1148
        %vm1152 = vcmask 195744
        %1153 = vst.msk [vmem:[#allocation2] sm:$0xff] %vm1152, %v1147
        %1154 = vst.msk [vmem:[#allocation2 + $0x8] sm:$0xff] %vm1152, %v1149
        %v1157 = vunpack.c.l.b16 %v946
        %v1158 = vunpack.c.l.b16 %v947
        %v1159 = vpack.c.b16 %v1158, %v1157
        %1160 = vrot.lane.b32.xlu0 %v454, 104
        %v1161 = vpop.permute.xlu0 %1160
        %v1164 = vsel %vm757, %v1159, 0
        %1166 = vmatpush.bf16.msra.mxu0 0
        %1167 = vmatpush.bf16.msra.mxu0 0
        %1168 = vmatpush.bf16.msra.mxu0 0
        %1169 = vmatpush.bf16.msra.mxu0 0
        %1170 = vmatpush.bf16.msra.mxu0 0
        %1171 = vmatpush.bf16.msra.mxu0 0
        %1172 = vmatpush.bf16.msra.mxu0 0
        %1173 = vmatpush.bf16.msra.mxu0 %v1161
        %1174 = vmatmul.bf16.gmra.mxu0 %v1164
        %v1175 = vpop.f32.mrf.mxu0
        %v1176 = vadd.f32 0.0, %v1175
        %v1177 = vpop.f32.mrf.mxu0
        %v1178 = vadd.f32 0.0, %v1177
        %1179 = vdwg.mxu0
        %1182 = vrot.lane.b32.xlu0 %v1176, 24
        %v1183 = vpop.permute.xlu0 %1182
        %1184 = vrot.lane.b32.xlu0 %v1178, 24
        %v1185 = vpop.permute.xlu0 %1184
        %vm1188 = vcmask 228544
        %1189 = vst.msk [vmem:[#allocation2] sm:$0xff] %vm1188, %v1183
        %1190 = vst.msk [vmem:[#allocation2 + $0x8] sm:$0xff] %vm1188, %v1185
        %v1193 = vunpack.c.l.b16 %v948
        %v1194 = vunpack.c.l.b16 %v949
        %v1195 = vpack.c.b16 %v1194, %v1193
        %1196 = vrot.lane.b32.xlu0 %v454, 100
        %v1197 = vpop.permute.xlu0 %1196
        %v1200 = vsel %vm757, %v1195, 0
        %1202 = vmatpush.bf16.msra.mxu0 0
        %1203 = vmatpush.bf16.msra.mxu0 0
        %1204 = vmatpush.bf16.msra.mxu0 0
        %1205 = vmatpush.bf16.msra.mxu0 0
        %1206 = vmatpush.bf16.msra.mxu0 0
        %1207 = vmatpush.bf16.msra.mxu0 0
        %1208 = vmatpush.bf16.msra.mxu0 0
        %1209 = vmatpush.bf16.msra.mxu0 %v1197
        %1210 = vmatmul.bf16.gmra.mxu0 %v1200
        %v1211 = vpop.f32.mrf.mxu0
        %v1212 = vadd.f32 0.0, %v1211
        %v1213 = vpop.f32.mrf.mxu0
        %v1214 = vadd.f32 0.0, %v1213
        %1215 = vdwg.mxu0
        %1218 = vrot.lane.b32.xlu0 %v1212, 28
        %v1219 = vpop.permute.xlu0 %1218
        %1220 = vrot.lane.b32.xlu0 %v1214, 28
        %v1221 = vpop.permute.xlu0 %1220
        %vm1224 = vcmask 261344
        %1225 = vst.msk [vmem:[#allocation2] sm:$0xff] %vm1224, %v1219
        %1226 = vst.msk [vmem:[#allocation2 + $0x8] sm:$0xff] %vm1224, %v1221
        %v1228 = vperm.slane %v336, 0
        %v1232 = vunpack.c.l.b16 %v330
        %v1233 = vunpack.c.l.b16 %v331
        %v1234 = vpack.c.b16 %v1233, %v1232
        %1235 = vrot.lane.b32.xlu0 %v454, 96
        %v1236 = vpop.permute.xlu0 %1235
        %v1239 = vsel %vm757, %v1234, 0
        %1241 = vmatpush.bf16.msra.mxu0 0
        %1242 = vmatpush.bf16.msra.mxu0 0
        %1243 = vmatpush.bf16.msra.mxu0 0
        %1244 = vmatpush.bf16.msra.mxu0 0
        %1245 = vmatpush.bf16.msra.mxu0 0
        %1246 = vmatpush.bf16.msra.mxu0 0
        %1247 = vmatpush.bf16.msra.mxu0 0
        %1248 = vmatpush.bf16.msra.mxu0 %v1236
        %1249 = vmatmul.bf16.gmra.mxu0 %v1239
        %v1250 = vpop.f32.mrf.mxu0
        %v1251 = vadd.f32 %v1228, %v1250
        %v1252 = vpop.f32.mrf.mxu0
        %v1253 = vadd.f32 %v1228, %v1252
        %1254 = vdwg.mxu0
        %1257 = vrot.lane.b32.xlu0 %v1251, 32
        %v1258 = vpop.permute.xlu0 %1257
        %1259 = vrot.lane.b32.xlu0 %v1253, 32
        %v1260 = vpop.permute.xlu0 %1259
        %vm1263 = vcmask 523520
        %1264 = vst.msk [vmem:[#allocation2] sm:$0xff] %vm1263, %v1258
        %1265 = vst.msk [vmem:[#allocation2 + $0x8] sm:$0xff] %vm1263, %v1260
        %v1266 = vld [vmem:[#allocation2] sm:$0xff]
        %v1267 = vld [vmem:[#allocation2 + $0x8] sm:$0xff]
        %vm1268 = vcmask 523264
        %1269 = vst.msk [vmem:[%s315] sm:$0xff] %vm1268, %v1266
        %1270 = vst.msk [vmem:[%s315 + $0x8] sm:$0xff] %vm1268, %v1267
        %1271 = vxpose.xlu0.b32.start [1/16] %v489, 128
        %1272 = vxpose.xlu0.b32.cont [2/16] %v491, 128
        %1273 = vxpose.xlu0.b32.cont [3/16] 0.0, 128
        %1274 = vxpose.xlu0.b32.cont [4/16] 0.0, 128
        %1275 = vxpose.xlu0.b32.cont [5/16] 0.0, 128
        %1276 = vxpose.xlu0.b32.cont [6/16] 0.0, 128
        %1277 = vxpose.xlu0.b32.cont [7/16] 0.0, 128
        %1278 = vxpose.xlu0.b32.cont [8/16] 0.0, 128
        %1279 = vxpose.xlu0.b32.cont [9/16] 0.0, 128
        %1280 = vxpose.xlu0.b32.cont [10/16] 0.0, 128
        %1281 = vxpose.xlu0.b32.cont [11/16] 0.0, 128
        %1282 = vxpose.xlu0.b32.cont [12/16] 0.0, 128
        %1283 = vxpose.xlu0.b32.cont [13/16] 0.0, 128
        %1284 = vxpose.xlu0.b32.cont [14/16] 0.0, 128
        %1285 = vxpose.xlu0.b32.cont [15/16] 0.0, 128
        %1286 = vxpose.xlu0.b32.end [16/16] 0.0, 128
        %v1287 = vpop.trf.xlu0
        %v1288 = vpop.trf.xlu0
        %v1289 = vpop.trf.xlu0
        %v1290 = vpop.trf.xlu0
        %v1291 = vpop.trf.xlu0
        %v1292 = vpop.trf.xlu0
        %v1293 = vpop.trf.xlu0
        %v1294 = vpop.trf.xlu0
        %v1295 = vpop.trf.xlu0
        %v1296 = vpop.trf.xlu0
        %v1297 = vpop.trf.xlu0
        %v1298 = vpop.trf.xlu0
        %v1299 = vpop.trf.xlu0
        %v1300 = vpop.trf.xlu0
        %v1301 = vpop.trf.xlu0
        %v1302 = vpop.trf.xlu0
        %1305 = vrot.lane.b32.xlu0 %v489, 120
        %v1306 = vpop.permute.xlu0 %1305
        %1307 = vrot.lane.b32.xlu0 %v491, 120
        %v1308 = vpop.permute.xlu0 %1307
        %1311 = vxpose.xlu0.b32.start [1/16] %v1306, 128
        %1312 = vxpose.xlu0.b32.cont [2/16] %v1308, 128
        %1313 = vxpose.xlu0.b32.cont [3/16] 0.0, 128
        %1314 = vxpose.xlu0.b32.cont [4/16] 0.0, 128
        %1315 = vxpose.xlu0.b32.cont [5/16] 0.0, 128
        %1316 = vxpose.xlu0.b32.cont [6/16] 0.0, 128
        %1317 = vxpose.xlu0.b32.cont [7/16] 0.0, 128
        %1318 = vxpose.xlu0.b32.cont [8/16] 0.0, 128
        %1319 = vxpose.xlu0.b32.cont [9/16] 0.0, 128
        %1320 = vxpose.xlu0.b32.cont [10/16] 0.0, 128
        %1321 = vxpose.xlu0.b32.cont [11/16] 0.0, 128
        %1322 = vxpose.xlu0.b32.cont [12/16] 0.0, 128
        %1323 = vxpose.xlu0.b32.cont [13/16] 0.0, 128
        %1324 = vxpose.xlu0.b32.cont [14/16] 0.0, 128
        %1325 = vxpose.xlu0.b32.cont [15/16] 0.0, 128
        %1326 = vxpose.xlu0.b32.end [16/16] 0.0, 128
        %v1327 = vpop.trf.xlu0
        %v1328 = vpop.trf.xlu0
        %v1329 = vpop.trf.xlu0
        %v1330 = vpop.trf.xlu0
        %v1331 = vpop.trf.xlu0
        %v1332 = vpop.trf.xlu0
        %v1333 = vpop.trf.xlu0
        %v1334 = vpop.trf.xlu0
        %v1335 = vpop.trf.xlu0
        %v1336 = vpop.trf.xlu0
        %v1337 = vpop.trf.xlu0
        %v1338 = vpop.trf.xlu0
        %v1339 = vpop.trf.xlu0
        %v1340 = vpop.trf.xlu0
        %v1341 = vpop.trf.xlu0
        %v1342 = vpop.trf.xlu0
        %v1343 = vperm.slane %v1287, 0
        %v1344 = vlaneseq
        %v1345 = vshrl.u32 %v1344, 7
        %1347 = vset.pattern.permute.xlu0 %v1345
        %1348 = vperm.xlu0 %1347, %v1343
        %v1349 = vpop.permute.xlu0 %1348
        %v1350 = vlaneseq
        %v1351 = vshrl.u32 %v1350, 7
        %v1352 = vadd.s32 %v1351, 8
        %1353 = vset.pattern.permute.xlu0 %v1352
        %1354 = vperm.xlu0 %1353, %v1343
        %v1355 = vpop.permute.xlu0 %1354
        %v1356 = vperm.slane %v1287, 1
        %v1357 = vlaneseq
        %v1358 = vshrl.u32 %v1357, 7
        %1360 = vset.pattern.permute.xlu0 %v1358
        %1361 = vperm.xlu0 %1360, %v1356
        %v1362 = vpop.permute.xlu0 %1361
        %v1363 = vlaneseq
        %v1364 = vshrl.u32 %v1363, 7
        %v1365 = vadd.s32 %v1364, 8
        %1366 = vset.pattern.permute.xlu0 %v1365
        %1367 = vperm.xlu0 %1366, %v1356
        %v1368 = vpop.permute.xlu0 %1367
        %v1369 = vperm.slane %v1287, 2
        %v1370 = vlaneseq
        %v1371 = vshrl.u32 %v1370, 7
        %1373 = vset.pattern.permute.xlu0 %v1371
        %1374 = vperm.xlu0 %1373, %v1369
        %v1375 = vpop.permute.xlu0 %1374
        %v1376 = vlaneseq
        %v1377 = vshrl.u32 %v1376, 7
        %v1378 = vadd.s32 %v1377, 8
        %1379 = vset.pattern.permute.xlu0 %v1378
        %1380 = vperm.xlu0 %1379, %v1369
        %v1381 = vpop.permute.xlu0 %1380
        %v1382 = vperm.slane %v1287, 3
        %v1383 = vlaneseq
        %v1384 = vshrl.u32 %v1383, 7
        %1386 = vset.pattern.permute.xlu0 %v1384
        %1387 = vperm.xlu0 %1386, %v1382
        %v1388 = vpop.permute.xlu0 %1387
        %v1389 = vlaneseq
        %v1390 = vshrl.u32 %v1389, 7
        %v1391 = vadd.s32 %v1390, 8
        %1392 = vset.pattern.permute.xlu0 %v1391
        %1393 = vperm.xlu0 %1392, %v1382
        %v1394 = vpop.permute.xlu0 %1393
        %v1395 = vperm.slane %v1287, 4
        %v1396 = vlaneseq
        %v1397 = vshrl.u32 %v1396, 7
        %1399 = vset.pattern.permute.xlu0 %v1397
        %1400 = vperm.xlu0 %1399, %v1395
        %v1401 = vpop.permute.xlu0 %1400
        %v1402 = vlaneseq
        %v1403 = vshrl.u32 %v1402, 7
        %v1404 = vadd.s32 %v1403, 8
        %1405 = vset.pattern.permute.xlu0 %v1404
        %1406 = vperm.xlu0 %1405, %v1395
        %v1407 = vpop.permute.xlu0 %1406
        %v1408 = vperm.slane %v1287, 5
        %v1409 = vlaneseq
        %v1410 = vshrl.u32 %v1409, 7
        %1412 = vset.pattern.permute.xlu0 %v1410
        %1413 = vperm.xlu0 %1412, %v1408
        %v1414 = vpop.permute.xlu0 %1413
        %v1415 = vlaneseq
        %v1416 = vshrl.u32 %v1415, 7
        %v1417 = vadd.s32 %v1416, 8
        %1418 = vset.pattern.permute.xlu0 %v1417
        %1419 = vperm.xlu0 %1418, %v1408
        %v1420 = vpop.permute.xlu0 %1419
        %v1421 = vperm.slane %v1287, 6
        %v1422 = vlaneseq
        %v1423 = vshrl.u32 %v1422, 7
        %1425 = vset.pattern.permute.xlu0 %v1423
        %1426 = vperm.xlu0 %1425, %v1421
        %v1427 = vpop.permute.xlu0 %1426
        %v1428 = vlaneseq
        %v1429 = vshrl.u32 %v1428, 7
        %v1430 = vadd.s32 %v1429, 8
        %1431 = vset.pattern.permute.xlu0 %v1430
        %1432 = vperm.xlu0 %1431, %v1421
        %v1433 = vpop.permute.xlu0 %1432
        %v1434 = vperm.slane %v1287, 7
        %v1435 = vlaneseq
        %v1436 = vshrl.u32 %v1435, 7
        %1438 = vset.pattern.permute.xlu0 %v1436
        %1439 = vperm.xlu0 %1438, %v1434
        %v1440 = vpop.permute.xlu0 %1439
        %v1441 = vlaneseq
        %v1442 = vshrl.u32 %v1441, 7
        %v1443 = vadd.s32 %v1442, 8
        %1444 = vset.pattern.permute.xlu0 %v1443
        %1445 = vperm.xlu0 %1444, %v1434
        %v1446 = vpop.permute.xlu0 %1445
        %v1448 = vrot.slane %v1327, 1
        %v1449 = vrot.slane %v1327, 2
        %v1450 = vrot.slane %v1327, 3
        %v1451 = vrot.slane %v1327, 4
        %v1452 = vrot.slane %v1327, 5
        %v1453 = vrot.slane %v1327, 6
        %v1454 = vrot.slane %v1327, 7
        %v1455 = vperm.slane %v1327, 0
        %v1456 = vperm.slane %v1448, 0
        %v1457 = vperm.slane %v1449, 0
        %v1458 = vperm.slane %v1450, 0
        %v1459 = vperm.slane %v1451, 0
        %v1460 = vperm.slane %v1452, 0
        %v1461 = vperm.slane %v1453, 0
        %v1462 = vperm.slane %v1454, 0
        %v1471 = vadd.f32 %v1349, %v1455
        %v1472 = vadd.f32 %v1355, %v1455
        %v1473 = vadd.f32 %v1362, %v1456
        %v1474 = vadd.f32 %v1368, %v1456
        %v1475 = vadd.f32 %v1375, %v1457
        %v1476 = vadd.f32 %v1381, %v1457
        %v1477 = vadd.f32 %v1388, %v1458
        %v1478 = vadd.f32 %v1394, %v1458
        %v1479 = vadd.f32 %v1401, %v1459
        %v1480 = vadd.f32 %v1407, %v1459
        %v1481 = vadd.f32 %v1414, %v1460
        %v1482 = vadd.f32 %v1420, %v1460
        %v1483 = vadd.f32 %v1427, %v1461
        %v1484 = vadd.f32 %v1433, %v1461
        %v1485 = vadd.f32 %v1440, %v1462
        %v1486 = vadd.f32 %v1446, %v1462
        %v1487 = vmul.f32 %v1471, 0.2
        %v1488 = vmul.f32 %v1472, 0.2
        %v1489 = vmul.f32 %v1473, 0.2
        %v1490 = vmul.f32 %v1474, 0.2
        %v1491 = vmul.f32 %v1475, 0.2
        %v1492 = vmul.f32 %v1476, 0.2
        %v1493 = vmul.f32 %v1477, 0.2
        %v1494 = vmul.f32 %v1478, 0.2
        %v1495 = vmul.f32 %v1479, 0.2
        %v1496 = vmul.f32 %v1480, 0.2
        %v1497 = vmul.f32 %v1481, 0.2
        %v1498 = vmul.f32 %v1482, 0.2
        %v1499 = vmul.f32 %v1483, 0.2
        %v1500 = vmul.f32 %v1484, 0.2
        %v1501 = vmul.f32 %v1485, 0.2
        %v1502 = vmul.f32 %v1486, 0.2
        %v1503 = vmax.f32 %v1471, %v1487
        %v1504 = vmax.f32 %v1472, %v1488
        %v1505 = vmax.f32 %v1473, %v1489
        %v1506 = vmax.f32 %v1474, %v1490
        %v1507 = vmax.f32 %v1475, %v1491
        %v1508 = vmax.f32 %v1476, %v1492
        %v1509 = vmax.f32 %v1477, %v1493
        %v1510 = vmax.f32 %v1478, %v1494
        %v1511 = vmax.f32 %v1479, %v1495
        %v1512 = vmax.f32 %v1480, %v1496
        %v1513 = vmax.f32 %v1481, %v1497
        %v1514 = vmax.f32 %v1482, %v1498
        %v1515 = vmax.f32 %v1483, %v1499
        %v1516 = vmax.f32 %v1484, %v1500
        %v1517 = vmax.f32 %v1485, %v1501
        %v1518 = vmax.f32 %v1486, %v1502
        %v1519 = vadd.f32 %v1503, %v334
        %v1520 = vadd.f32 %v1504, %v335
        %v1521 = vadd.f32 %v1505, %v334
        %v1522 = vadd.f32 %v1506, %v335
        %v1523 = vadd.f32 %v1507, %v334
        %v1524 = vadd.f32 %v1508, %v335
        %v1525 = vadd.f32 %v1509, %v334
        %v1526 = vadd.f32 %v1510, %v335
        %v1527 = vadd.f32 %v1511, %v334
        %v1528 = vadd.f32 %v1512, %v335
        %v1529 = vadd.f32 %v1513, %v334
        %v1530 = vadd.f32 %v1514, %v335
        %v1531 = vadd.f32 %v1515, %v334
        %v1532 = vadd.f32 %v1516, %v335
        %v1533 = vadd.f32 %v1517, %v334
        %v1534 = vadd.f32 %v1518, %v335
        %v1535 = vsel %vm757, %v1519, -inf
        %1536 = vmax.xlane.f32.xlu0 %v1535
        %v1537 = vpop.xlane.xlu0 %1536
        %v1538 = vsel %vm757, %v1520, -inf
        %1539 = vmax.xlane.f32.xlu0 %v1538
        %v1540 = vpop.xlane.xlu0 %1539
        %v1541 = vsel %vm757, %v1521, -inf
        %1542 = vmax.xlane.f32.xlu0 %v1541
        %v1543 = vpop.xlane.xlu0 %1542
        %v1544 = vsel %vm757, %v1522, -inf
        %1545 = vmax.xlane.f32.xlu0 %v1544
        %v1546 = vpop.xlane.xlu0 %1545
        %v1547 = vsel %vm757, %v1523, -inf
        %1548 = vmax.xlane.f32.xlu0 %v1547
        %v1549 = vpop.xlane.xlu0 %1548
        %v1550 = vsel %vm757, %v1524, -inf
        %1551 = vmax.xlane.f32.xlu0 %v1550
        %v1552 = vpop.xlane.xlu0 %1551
        %v1553 = vsel %vm757, %v1525, -inf
        %1554 = vmax.xlane.f32.xlu0 %v1553
        %v1555 = vpop.xlane.xlu0 %1554
        %v1556 = vsel %vm757, %v1526, -inf
        %1557 = vmax.xlane.f32.xlu0 %v1556
        %v1558 = vpop.xlane.xlu0 %1557
        %v1559 = vsel %vm757, %v1527, -inf
        %1560 = vmax.xlane.f32.xlu0 %v1559
        %v1561 = vpop.xlane.xlu0 %1560
        %v1562 = vsel %vm757, %v1528, -inf
        %1563 = vmax.xlane.f32.xlu0 %v1562
        %v1564 = vpop.xlane.xlu0 %1563
        %v1565 = vsel %vm757, %v1529, -inf
        %1566 = vmax.xlane.f32.xlu0 %v1565
        %v1567 = vpop.xlane.xlu0 %1566
        %v1568 = vsel %vm757, %v1530, -inf
        %1569 = vmax.xlane.f32.xlu0 %v1568
        %v1570 = vpop.xlane.xlu0 %1569
        %v1571 = vsel %vm757, %v1531, -inf
        %1572 = vmax.xlane.f32.xlu0 %v1571
        %v1573 = vpop.xlane.xlu0 %1572
        %v1574 = vsel %vm757, %v1532, -inf
        %1575 = vmax.xlane.f32.xlu0 %v1574
        %v1576 = vpop.xlane.xlu0 %1575
        %v1577 = vsel %vm757, %v1533, -inf
        %1578 = vmax.xlane.f32.xlu0 %v1577
        %v1579 = vpop.xlane.xlu0 %1578
        %v1580 = vsel %vm757, %v1534, -inf
        %1581 = vmax.xlane.f32.xlu0 %v1580
        %v1582 = vpop.xlane.xlu0 %1581
        %v1583 = vsub.f32 %v1519, %v1537
        %v1584 = vsub.f32 %v1520, %v1540
        %v1585 = vsub.f32 %v1521, %v1543
        %v1586 = vsub.f32 %v1522, %v1546
        %v1587 = vsub.f32 %v1523, %v1549
        %v1588 = vsub.f32 %v1524, %v1552
        %v1589 = vsub.f32 %v1525, %v1555
        %v1590 = vsub.f32 %v1526, %v1558
        %v1591 = vsub.f32 %v1527, %v1561
        %v1592 = vsub.f32 %v1528, %v1564
        %v1593 = vsub.f32 %v1529, %v1567
        %v1594 = vsub.f32 %v1530, %v1570
        %v1595 = vsub.f32 %v1531, %v1573
        %v1596 = vsub.f32 %v1532, %v1576
        %v1597 = vsub.f32 %v1533, %v1579
        %v1598 = vsub.f32 %v1534, %v1582
        %v1599 = vmul.f32 %v1583, 1.442695
        %v1600 = vpow.pop %v1599
        %v1601 = vmul.f32 %v1584, 1.442695
        %v1602 = vpow.pop %v1601
        %v1603 = vmul.f32 %v1585, 1.442695
        %v1604 = vpow.pop %v1603
        %v1605 = vmul.f32 %v1586, 1.442695
        %v1606 = vpow.pop %v1605
        %v1607 = vmul.f32 %v1587, 1.442695
        %v1608 = vpow.pop %v1607
        %v1609 = vmul.f32 %v1588, 1.442695
        %v1610 = vpow.pop %v1609
        %v1611 = vmul.f32 %v1589, 1.442695
        %v1612 = vpow.pop %v1611
        %v1613 = vmul.f32 %v1590, 1.442695
        %v1614 = vpow.pop %v1613
        %v1615 = vmul.f32 %v1591, 1.442695
        %v1616 = vpow.pop %v1615
        %v1617 = vmul.f32 %v1592, 1.442695
        %v1618 = vpow.pop %v1617
        %v1619 = vmul.f32 %v1593, 1.442695
        %v1620 = vpow.pop %v1619
        %v1621 = vmul.f32 %v1594, 1.442695
        %v1622 = vpow.pop %v1621
        %v1623 = vmul.f32 %v1595, 1.442695
        %v1624 = vpow.pop %v1623
        %v1625 = vmul.f32 %v1596, 1.442695
        %v1626 = vpow.pop %v1625
        %v1627 = vmul.f32 %v1597, 1.442695
        %v1628 = vpow.pop %v1627
        %v1629 = vmul.f32 %v1598, 1.442695
        %v1630 = vpow.pop %v1629
        %v1631 = vsel %vm757, %v1600, 0.0
        %1632 = vadd.xlane.f32.xlu0 %v1631
        %v1633 = vpop.xlane.xlu0 %1632
        %v1634 = vsel %vm757, %v1602, 0.0
        %1635 = vadd.xlane.f32.xlu0 %v1634
        %v1636 = vpop.xlane.xlu0 %1635
        %v1637 = vsel %vm757, %v1604, 0.0
        %1638 = vadd.xlane.f32.xlu0 %v1637
        %v1639 = vpop.xlane.xlu0 %1638
        %v1640 = vsel %vm757, %v1606, 0.0
        %1641 = vadd.xlane.f32.xlu0 %v1640
        %v1642 = vpop.xlane.xlu0 %1641
        %v1643 = vsel %vm757, %v1608, 0.0
        %1644 = vadd.xlane.f32.xlu0 %v1643
        %v1645 = vpop.xlane.xlu0 %1644
        %v1646 = vsel %vm757, %v1610, 0.0
        %1647 = vadd.xlane.f32.xlu0 %v1646
        %v1648 = vpop.xlane.xlu0 %1647
        %v1649 = vsel %vm757, %v1612, 0.0
        %1650 = vadd.xlane.f32.xlu0 %v1649
        %v1651 = vpop.xlane.xlu0 %1650
        %v1652 = vsel %vm757, %v1614, 0.0
        %1653 = vadd.xlane.f32.xlu0 %v1652
        %v1654 = vpop.xlane.xlu0 %1653
        %v1655 = vsel %vm757, %v1616, 0.0
        %1656 = vadd.xlane.f32.xlu0 %v1655
        %v1657 = vpop.xlane.xlu0 %1656
        %v1658 = vsel %vm757, %v1618, 0.0
        %1659 = vadd.xlane.f32.xlu0 %v1658
        %v1660 = vpop.xlane.xlu0 %1659
        %v1661 = vsel %vm757, %v1620, 0.0
        %1662 = vadd.xlane.f32.xlu0 %v1661
        %v1663 = vpop.xlane.xlu0 %1662
        %v1664 = vsel %vm757, %v1622, 0.0
        %1665 = vadd.xlane.f32.xlu0 %v1664
        %v1666 = vpop.xlane.xlu0 %1665
        %v1667 = vsel %vm757, %v1624, 0.0
        %1668 = vadd.xlane.f32.xlu0 %v1667
        %v1669 = vpop.xlane.xlu0 %1668
        %v1670 = vsel %vm757, %v1626, 0.0
        %1671 = vadd.xlane.f32.xlu0 %v1670
        %v1672 = vpop.xlane.xlu0 %1671
        %v1673 = vsel %vm757, %v1628, 0.0
        %1674 = vadd.xlane.f32.xlu0 %v1673
        %v1675 = vpop.xlane.xlu0 %1674
        %v1676 = vsel %vm757, %v1630, 0.0
        %1677 = vadd.xlane.f32.xlu0 %v1676
        %v1678 = vpop.xlane.xlu0 %1677
        %v1679 = vrcp.pop %v1633
        %v1680 = vrcp.pop %v1636
        %v1681 = vrcp.pop %v1639
        %v1682 = vrcp.pop %v1642
        %v1683 = vrcp.pop %v1645
        %v1684 = vrcp.pop %v1648
        %v1685 = vrcp.pop %v1651
        %v1686 = vrcp.pop %v1654
        %v1687 = vrcp.pop %v1657
        %v1688 = vrcp.pop %v1660
        %v1689 = vrcp.pop %v1663
        %v1690 = vrcp.pop %v1666
        %v1691 = vrcp.pop %v1669
        %v1692 = vrcp.pop %v1672
        %v1693 = vrcp.pop %v1675
        %v1694 = vrcp.pop %v1678
        %v1695 = vmul.f32 %v1600, %v1679
        %v1696 = vmul.f32 %v1602, %v1680
        %v1697 = vmul.f32 %v1604, %v1681
        %v1698 = vmul.f32 %v1606, %v1682
        %v1699 = vmul.f32 %v1608, %v1683
        %v1700 = vmul.f32 %v1610, %v1684
        %v1701 = vmul.f32 %v1612, %v1685
        %v1702 = vmul.f32 %v1614, %v1686
        %v1703 = vmul.f32 %v1616, %v1687
        %v1704 = vmul.f32 %v1618, %v1688
        %v1705 = vmul.f32 %v1620, %v1689
        %v1706 = vmul.f32 %v1622, %v1690
        %v1707 = vmul.f32 %v1624, %v1691
        %v1708 = vmul.f32 %v1626, %v1692
        %v1709 = vmul.f32 %v1628, %v1693
        %v1710 = vmul.f32 %v1630, %v1694
        %v1711 = vpack.c.bf16 %v1695, %v1695
        %v1712 = vpack.c.bf16 %v1696, %v1696
        %v1713 = vpack.c.bf16 %v1697, %v1697
        %v1714 = vpack.c.bf16 %v1698, %v1698
        %v1715 = vpack.c.bf16 %v1699, %v1699
        %v1716 = vpack.c.bf16 %v1700, %v1700
        %v1717 = vpack.c.bf16 %v1701, %v1701
        %v1718 = vpack.c.bf16 %v1702, %v1702
        %v1719 = vpack.c.bf16 %v1703, %v1703
        %v1720 = vpack.c.bf16 %v1704, %v1704
        %v1721 = vpack.c.bf16 %v1705, %v1705
        %v1722 = vpack.c.bf16 %v1706, %v1706
        %v1723 = vpack.c.bf16 %v1707, %v1707
        %v1724 = vpack.c.bf16 %v1708, %v1708
        %v1725 = vpack.c.bf16 %v1709, %v1709
        %v1726 = vpack.c.bf16 %v1710, %v1710
        %v1729 = vunpack.c.l.b16 %v1711
        %v1730 = vunpack.c.l.b16 %v1712
        %v1731 = vpack.c.b16 %v1730, %v1729
        %v1734 = vsel %vm757, %v1731, 0
        %1736 = vmatpush.bf16.msra.mxu0 0
        %1737 = vmatpush.bf16.msra.mxu0 0
        %1738 = vmatpush.bf16.msra.mxu0 0
        %1739 = vmatpush.bf16.msra.mxu0 0
        %1740 = vmatpush.bf16.msra.mxu0 0
        %1741 = vmatpush.bf16.msra.mxu0 0
        %1742 = vmatpush.bf16.msra.mxu0 0
        %1743 = vmatpush.bf16.msra.mxu0 %v455
        %1744 = vmatmul.bf16.gmra.mxu0 %v1734
        %v1745 = vpop.f32.mrf.mxu0
        %v1746 = vadd.f32 0.0, %v1745
        %v1747 = vpop.f32.mrf.mxu0
        %v1748 = vadd.f32 0.0, %v1747
        %1749 = vdwg.mxu0
        %1750 = vst.msk [vmem:[#allocation2] sm:$0xff] %vm408, %v1746
        %1751 = vst.msk [vmem:[#allocation2 + $0x8] sm:$0xff] %vm408, %v1748
        %v1754 = vunpack.c.l.b16 %v1713
        %v1755 = vunpack.c.l.b16 %v1714
        %v1756 = vpack.c.b16 %v1755, %v1754
        %1757 = vrot.lane.b32.xlu0 %v455, 124
        %v1758 = vpop.permute.xlu0 %1757
        %v1761 = vsel %vm757, %v1756, 0
        %1763 = vmatpush.bf16.msra.mxu0 0
        %1764 = vmatpush.bf16.msra.mxu0 0
        %1765 = vmatpush.bf16.msra.mxu0 0
        %1766 = vmatpush.bf16.msra.mxu0 0
        %1767 = vmatpush.bf16.msra.mxu0 0
        %1768 = vmatpush.bf16.msra.mxu0 0
        %1769 = vmatpush.bf16.msra.mxu0 0
        %1770 = vmatpush.bf16.msra.mxu0 %v1758
        %1771 = vmatmul.bf16.gmra.mxu0 %v1761
        %v1772 = vpop.f32.mrf.mxu0
        %v1773 = vadd.f32 0.0, %v1772
        %v1774 = vpop.f32.mrf.mxu0
        %v1775 = vadd.f32 0.0, %v1774
        %1776 = vdwg.mxu0
        %1779 = vrot.lane.b32.xlu0 %v1773, 4
        %v1780 = vpop.permute.xlu0 %1779
        %1781 = vrot.lane.b32.xlu0 %v1775, 4
        %v1782 = vpop.permute.xlu0 %1781
        %1785 = vst.msk [vmem:[#allocation2] sm:$0xff] %vm1008, %v1780
        %1786 = vst.msk [vmem:[#allocation2 + $0x8] sm:$0xff] %vm1008, %v1782
        %v1789 = vunpack.c.l.b16 %v1715
        %v1790 = vunpack.c.l.b16 %v1716
        %v1791 = vpack.c.b16 %v1790, %v1789
        %1792 = vrot.lane.b32.xlu0 %v455, 120
        %v1793 = vpop.permute.xlu0 %1792
        %v1796 = vsel %vm757, %v1791, 0
        %1798 = vmatpush.bf16.msra.mxu0 0
        %1799 = vmatpush.bf16.msra.mxu0 0
        %1800 = vmatpush.bf16.msra.mxu0 0
        %1801 = vmatpush.bf16.msra.mxu0 0
        %1802 = vmatpush.bf16.msra.mxu0 0
        %1803 = vmatpush.bf16.msra.mxu0 0
        %1804 = vmatpush.bf16.msra.mxu0 0
        %1805 = vmatpush.bf16.msra.mxu0 %v1793
        %1806 = vmatmul.bf16.gmra.mxu0 %v1796
        %v1807 = vpop.f32.mrf.mxu0
        %v1808 = vadd.f32 0.0, %v1807
        %v1809 = vpop.f32.mrf.mxu0
        %v1810 = vadd.f32 0.0, %v1809
        %1811 = vdwg.mxu0
        %1814 = vrot.lane.b32.xlu0 %v1808, 8
        %v1815 = vpop.permute.xlu0 %1814
        %1816 = vrot.lane.b32.xlu0 %v1810, 8
        %v1817 = vpop.permute.xlu0 %1816
        %1820 = vst.msk [vmem:[#allocation2] sm:$0xff] %vm1044, %v1815
        %1821 = vst.msk [vmem:[#allocation2 + $0x8] sm:$0xff] %vm1044, %v1817
        %v1824 = vunpack.c.l.b16 %v1717
        %v1825 = vunpack.c.l.b16 %v1718
        %v1826 = vpack.c.b16 %v1825, %v1824
        %1827 = vrot.lane.b32.xlu0 %v455, 116
        %v1828 = vpop.permute.xlu0 %1827
        %v1831 = vsel %vm757, %v1826, 0
        %1833 = vmatpush.bf16.msra.mxu0 0
        %1834 = vmatpush.bf16.msra.mxu0 0
        %1835 = vmatpush.bf16.msra.mxu0 0
        %1836 = vmatpush.bf16.msra.mxu0 0
        %1837 = vmatpush.bf16.msra.mxu0 0
        %1838 = vmatpush.bf16.msra.mxu0 0
        %1839 = vmatpush.bf16.msra.mxu0 0
        %1840 = vmatpush.bf16.msra.mxu0 %v1828
        %1841 = vmatmul.bf16.gmra.mxu0 %v1831
        %v1842 = vpop.f32.mrf.mxu0
        %v1843 = vadd.f32 0.0, %v1842
        %v1844 = vpop.f32.mrf.mxu0
        %v1845 = vadd.f32 0.0, %v1844
        %1846 = vdwg.mxu0
        %1849 = vrot.lane.b32.xlu0 %v1843, 12
        %v1850 = vpop.permute.xlu0 %1849
        %1851 = vrot.lane.b32.xlu0 %v1845, 12
        %v1852 = vpop.permute.xlu0 %1851
        %1855 = vst.msk [vmem:[#allocation2] sm:$0xff] %vm1080, %v1850
        %1856 = vst.msk [vmem:[#allocation2 + $0x8] sm:$0xff] %vm1080, %v1852
        %v1859 = vunpack.c.l.b16 %v1719
        %v1860 = vunpack.c.l.b16 %v1720
        %v1861 = vpack.c.b16 %v1860, %v1859
        %1862 = vrot.lane.b32.xlu0 %v455, 112
        %v1863 = vpop.permute.xlu0 %1862
        %v1866 = vsel %vm757, %v1861, 0
        %1868 = vmatpush.bf16.msra.mxu0 0
        %1869 = vmatpush.bf16.msra.mxu0 0
        %1870 = vmatpush.bf16.msra.mxu0 0
        %1871 = vmatpush.bf16.msra.mxu0 0
        %1872 = vmatpush.bf16.msra.mxu0 0
        %1873 = vmatpush.bf16.msra.mxu0 0
        %1874 = vmatpush.bf16.msra.mxu0 0
        %1875 = vmatpush.bf16.msra.mxu0 %v1863
        %1876 = vmatmul.bf16.gmra.mxu0 %v1866
        %v1877 = vpop.f32.mrf.mxu0
        %v1878 = vadd.f32 0.0, %v1877
        %v1879 = vpop.f32.mrf.mxu0
        %v1880 = vadd.f32 0.0, %v1879
        %1881 = vdwg.mxu0
        %1884 = vrot.lane.b32.xlu0 %v1878, 16
        %v1885 = vpop.permute.xlu0 %1884
        %1886 = vrot.lane.b32.xlu0 %v1880, 16
        %v1887 = vpop.permute.xlu0 %1886
        %1890 = vst.msk [vmem:[#allocation2] sm:$0xff] %vm1116, %v1885
        %1891 = vst.msk [vmem:[#allocation2 + $0x8] sm:$0xff] %vm1116, %v1887
        %v1894 = vunpack.c.l.b16 %v1721
        %v1895 = vunpack.c.l.b16 %v1722
        %v1896 = vpack.c.b16 %v1895, %v1894
        %1897 = vrot.lane.b32.xlu0 %v455, 108
        %v1898 = vpop.permute.xlu0 %1897
        %v1901 = vsel %vm757, %v1896, 0
        %1903 = vmatpush.bf16.msra.mxu0 0
        %1904 = vmatpush.bf16.msra.mxu0 0
        %1905 = vmatpush.bf16.msra.mxu0 0
        %1906 = vmatpush.bf16.msra.mxu0 0
        %1907 = vmatpush.bf16.msra.mxu0 0
        %1908 = vmatpush.bf16.msra.mxu0 0
        %1909 = vmatpush.bf16.msra.mxu0 0
        %1910 = vmatpush.bf16.msra.mxu0 %v1898
        %1911 = vmatmul.bf16.gmra.mxu0 %v1901
        %v1912 = vpop.f32.mrf.mxu0
        %v1913 = vadd.f32 0.0, %v1912
        %v1914 = vpop.f32.mrf.mxu0
        %v1915 = vadd.f32 0.0, %v1914
        %1916 = vdwg.mxu0
        %1919 = vrot.lane.b32.xlu0 %v1913, 20
        %v1920 = vpop.permute.xlu0 %1919
        %1921 = vrot.lane.b32.xlu0 %v1915, 20
        %v1922 = vpop.permute.xlu0 %1921
        %1925 = vst.msk [vmem:[#allocation2] sm:$0xff] %vm1152, %v1920
        %1926 = vst.msk [vmem:[#allocation2 + $0x8] sm:$0xff] %vm1152, %v1922
        %v1929 = vunpack.c.l.b16 %v1723
        %v1930 = vunpack.c.l.b16 %v1724
        %v1931 = vpack.c.b16 %v1930, %v1929
        %1932 = vrot.lane.b32.xlu0 %v455, 104
        %v1933 = vpop.permute.xlu0 %1932
        %v1936 = vsel %vm757, %v1931, 0
        %1938 = vmatpush.bf16.msra.mxu0 0
        %1939 = vmatpush.bf16.msra.mxu0 0
        %1940 = vmatpush.bf16.msra.mxu0 0
        %1941 = vmatpush.bf16.msra.mxu0 0
        %1942 = vmatpush.bf16.msra.mxu0 0
        %1943 = vmatpush.bf16.msra.mxu0 0
        %1944 = vmatpush.bf16.msra.mxu0 0
        %1945 = vmatpush.bf16.msra.mxu0 %v1933
        %1946 = vmatmul.bf16.gmra.mxu0 %v1936
        %v1947 = vpop.f32.mrf.mxu0
        %v1948 = vadd.f32 0.0, %v1947
        %v1949 = vpop.f32.mrf.mxu0
        %v1950 = vadd.f32 0.0, %v1949
        %1951 = vdwg.mxu0
        %1954 = vrot.lane.b32.xlu0 %v1948, 24
        %v1955 = vpop.permute.xlu0 %1954
        %1956 = vrot.lane.b32.xlu0 %v1950, 24
        %v1957 = vpop.permute.xlu0 %1956
        %1960 = vst.msk [vmem:[#allocation2] sm:$0xff] %vm1188, %v1955
        %1961 = vst.msk [vmem:[#allocation2 + $0x8] sm:$0xff] %vm1188, %v1957
        %v1964 = vunpack.c.l.b16 %v1725
        %v1965 = vunpack.c.l.b16 %v1726
        %v1966 = vpack.c.b16 %v1965, %v1964
        %1967 = vrot.lane.b32.xlu0 %v455, 100
        %v1968 = vpop.permute.xlu0 %1967
        %v1971 = vsel %vm757, %v1966, 0
        %1973 = vmatpush.bf16.msra.mxu0 0
        %1974 = vmatpush.bf16.msra.mxu0 0
        %1975 = vmatpush.bf16.msra.mxu0 0
        %1976 = vmatpush.bf16.msra.mxu0 0
        %1977 = vmatpush.bf16.msra.mxu0 0
        %1978 = vmatpush.bf16.msra.mxu0 0
        %1979 = vmatpush.bf16.msra.mxu0 0
        %1980 = vmatpush.bf16.msra.mxu0 %v1968
        %1981 = vmatmul.bf16.gmra.mxu0 %v1971
        %v1982 = vpop.f32.mrf.mxu0
        %v1983 = vadd.f32 0.0, %v1982
        %v1984 = vpop.f32.mrf.mxu0
        %v1985 = vadd.f32 0.0, %v1984
        %1986 = vdwg.mxu0
        %1989 = vrot.lane.b32.xlu0 %v1983, 28
        %v1990 = vpop.permute.xlu0 %1989
        %1991 = vrot.lane.b32.xlu0 %v1985, 28
        %v1992 = vpop.permute.xlu0 %1991
        %1995 = vst.msk [vmem:[#allocation2] sm:$0xff] %vm1224, %v1990
        %1996 = vst.msk [vmem:[#allocation2 + $0x8] sm:$0xff] %vm1224, %v1992
        %1997 = vrot.lane.b32.xlu0 %v455, 96
        %v1998 = vpop.permute.xlu0 %1997
        %2000 = vmatpush.bf16.msra.mxu0 0
        %2001 = vmatpush.bf16.msra.mxu0 0
        %2002 = vmatpush.bf16.msra.mxu0 0
        %2003 = vmatpush.bf16.msra.mxu0 0
        %2004 = vmatpush.bf16.msra.mxu0 0
        %2005 = vmatpush.bf16.msra.mxu0 0
        %2006 = vmatpush.bf16.msra.mxu0 0
        %2007 = vmatpush.bf16.msra.mxu0 %v1998
        %2008 = vmatmul.bf16.gmra.mxu0 %v1239
        %v2009 = vpop.f32.mrf.mxu0
        %v2010 = vadd.f32 %v1228, %v2009
        %v2011 = vpop.f32.mrf.mxu0
        %v2012 = vadd.f32 %v1228, %v2011
        %2013 = vdwg.mxu0
        %2016 = vrot.lane.b32.xlu0 %v2010, 32
        %v2017 = vpop.permute.xlu0 %2016
        %2018 = vrot.lane.b32.xlu0 %v2012, 32
        %v2019 = vpop.permute.xlu0 %2018
        %2022 = vst.msk [vmem:[#allocation2] sm:$0xff] %vm1263, %v2017
        %2023 = vst.msk [vmem:[#allocation2 + $0x8] sm:$0xff] %vm1263, %v2019
        %v2024 = vld [vmem:[#allocation2] sm:$0xff]
        %v2025 = vld [vmem:[#allocation2 + $0x8] sm:$0xff]
        %2026 = vst.msk [vmem:[%s315 + $0x10] sm:$0xff] %vm1268, %v2024
        %2027 = vst.msk [vmem:[%s315 + $0x18] sm:$0xff] %vm1268, %v2025
        %s2028 = sand.u32 %s208, 1
        %s2029 = scalar_lea.sflag [#allocation4], %s2028
        %s2030 = sand.u32 %s208, 1
        %s2031 = smul.addr %s2030, 32
        %s2032 = scalar_lea.vmem [#allocation3], %s2031
        // Predicated region
        $region53: #{tpu_custom_call.1} parent=51 // pred_check
          %p2033 = pneg %p218
        $region54: #{tpu_custom_call.1} parent=51 // pred_check_branch
          %2035 = sbr.rel (%p2033) target = $region56
        $region55: #{tpu_custom_call.1} parent=51 // pred_region
          %s2036 = smul.u32 4, %s22
          %2038 = vsyncadd %s2029, 0
          %s2039 = smul.addr %s2036, 8
          %s2040 = scalar_lea.hbm %s8, %s2039
          %s2041 = sshll.u32 %s2032, 4
          %s2042 = int_to_ptr.vmem [resolvable:$true] %s2041
          %s2043 = sshll.u32 %s2040, 4
          %s2044 = int_to_ptr.hbm [resolvable:$true] %s2043
          %2049 = dma.vmem_to_hbm [thread:$0]  %s2042, 512, %s2044, %s2029, 128, 128, 8
        $region56: #{tpu_custom_call.1} parent=51 // pred_fallthru
          _
      $region52: #{tpu_custom_call.1} parent=5 // pred_fallthru
        _
      %p2050 = scmp.le.s32.totalorder 2, %s17
      // Predicated region
      $region57: #{tpu_custom_call.1} parent=5 // pred_check
        %p2051 = pneg %p2050
      $region58: #{tpu_custom_call.1} parent=5 // pred_check_branch
        %2053 = sbr.rel (%p2051) target = $region60
      $region59: #{tpu_custom_call.1} parent=5 // pred_region
        %s2054 = ssub.s32 %s17, 2
        // Predicated region
        $region61: #{tpu_custom_call.1} parent=59 // pred_check
          %p2055 = pneg %p224
        $region62: #{tpu_custom_call.1} parent=59 // pred_check_branch
          %2057 = sbr.rel (%p2055) target = $region64
        $region63: #{tpu_custom_call.1} parent=59 // pred_region
          %s2058 = sand.u32 %s209, 1
          %s2059 = scalar_lea.sflag [#allocation4], %s2058
          %s2060 = sand.u32 %s209, 1
          %s2061 = smul.addr %s2060, 32
          %s2062 = scalar_lea.vmem [#allocation3], %s2061
          %2064 = dma.done %s2059, 512
        $region64: #{tpu_custom_call.1} parent=59 // pred_fallthru
          _
      $region60: #{tpu_custom_call.1} parent=5 // pred_fallthru
        _
    $region6: #{tpu_custom_call.1} parent=1 // loop_footer
      %s21 = sadd.s32 1, %s17
    $region7: #{tpu_custom_call.1} parent=1 // loop_footer_branch
      %16 = sbr.rel target = $region3
    $region8: #{tpu_custom_call.1} parent=1 // loop_exit
      _
    %2065 = vsyncpa [#allocation4], 1
    %s2066 = scalar_lea.sflag [#allocation4], 1
    %2067 = vsyncpa %s2066, 1

</llo_original>
